<compile_context>
chip_gen: v7x
topology: tpu7x:2x2x1
jax: 0.10.0
libtpu: 0.0.40
codegen_flags: <defaults>
</compile_context>

<pallas_src>
import jax
import jax.numpy as jnp
from jax import lax
from jax.experimental import pallas as pl
from jax.experimental.pallas import tpu as pltpu

IN_FEATURES = 1536
OUT_FEATURES = 384
INV_SQRT2 = 0.7071067811865476


def gelu_linear_kernel(x_ref, wt_ref, b_ref, o_ref):
    # x_ref:  (M, TK)        flattened activation slab (f32)
    # wt_ref: (TK, C_out)    weight slab, pre-transposed to (in, out) layout (f32)
    # b_ref:  (1, C_out)     bias (resident across K steps)
    # o_ref:  (M, C_out)     f32, resident across the K grid axis — doubles as accumulator
    k = pl.program_id(0)

    @pl.when(k == 0)
    def _():
        # Initialize the resident output with the broadcast bias (replaces the
        # zero-init + epilogue add of the previous version).
        o_ref[...] = jnp.broadcast_to(b_ref[...], o_ref.shape)

    x = x_ref[...]
    # exact (erf-based) GELU, matches torch.nn.GELU(approximate='none')
    g = 0.5 * x * (1.0 + lax.erf(x * INV_SQRT2))

    # MXU-native (M,K) x (K,N) contraction — weight is already (C_in, C_out).
    o_ref[...] += lax.dot_general(
        g, wt_ref[...],
        dimension_numbers=(((1,), (0,)), ((), ())),
        preferred_element_type=jnp.float32,
    )


def prepare_weight(weight):
    """One-time parameter prep: PyTorch (C_out, C_in) -> MXU-native (C_in, C_out)."""
    return jnp.asarray(weight).T


def gelu_linear(x, weight_t, bias, *, tk=512):
    """y = Linear(GELU(x)).

    x:        (N, H, W, C_in)  channels-last activations (f32)
    weight_t: (C_in, C_out)    pre-transposed weight (see prepare_weight)
    bias:     (C_out,)
    """
    n, h, w, c_in = x.shape
    c_out = weight_t.shape[1]
    m = n * h * w
    assert c_in % tk == 0, "tk must divide C_in"
    k_steps = c_in // tk

    x2d = x.reshape(m, c_in)      # contiguous reshape — no copy
    b2d = bias.reshape(1, c_out)

    itemsize = jnp.dtype(x.dtype).itemsize
    cost = pl.CostEstimate(
        flops=2 * m * c_in * c_out,
        transcendentals=m * c_in,  # one erf per input element
        bytes_accessed=(m * c_in + c_in * c_out + c_out + m * c_out) * itemsize,
    )

    out2d = pl.pallas_call(
        gelu_linear_kernel,
        out_shape=jax.ShapeDtypeStruct((m, c_out), x.dtype),
        grid_spec=pltpu.PrefetchScalarGridSpec(
            num_scalar_prefetch=0,
            grid=(k_steps,),
            in_specs=[
                pl.BlockSpec((m, tk), lambda k: (0, k)),        # activations
                pl.BlockSpec((tk, c_out), lambda k: (k, 0)),    # weight (in, out)
                pl.BlockSpec((1, c_out), lambda k: (0, 0)),     # bias (resident)
            ],
            out_specs=pl.BlockSpec((m, c_out), lambda k: (0, 0)),
        ),
        compiler_params=pltpu.CompilerParams(
            dimension_semantics=("arbitrary",),   # K is a reduction axis
        ),
        cost_estimate=cost,
    )(x2d, weight_t, b2d)

    # TODO(synk): when M grows beyond ~196 (batch > 1), add a leading "parallel"
    # M grid axis (TILE_M multiple of 8) so v7x megacore splits the GELU work
    # and the full-M-resident VMEM footprint stays bounded.
    return out2d.reshape(n, h, w, c_out)


def reference(x, weight, bias):
    g = 0.5 * x * (1.0 + lax.erf(x * INV_SQRT2))
    return jnp.einsum("nhwc,oc->nhwo", g, weight) + bias


if __name__ == "__main__":
    key = jax.random.PRNGKey(0)
    kx, kw, kb = jax.random.split(key, 3)

    # Input shape implied by the module's forward: (1, 14, 14, 1536)
    x = jax.random.normal(kx, (1, 14, 14, IN_FEATURES), dtype=jnp.float32)

    # PyTorch Linear layout: weight (out, in), bias (out,)
    bound = 1.0 / (IN_FEATURES ** 0.5)
    weight = jax.random.uniform(kw, (OUT_FEATURES, IN_FEATURES),
                                dtype=jnp.float32, minval=-bound, maxval=bound)
    bias = jax.random.uniform(kb, (OUT_FEATURES,),
                              dtype=jnp.float32, minval=-bound, maxval=bound)

    # One-time parameter prep (amortized across calls).
    weight_t = prepare_weight(weight)

    out = gelu_linear(x, weight_t, bias)
    jax.block_until_ready(out)

    ref = reference(x, weight, bias)
    assert out.shape == (1, 14, 14, OUT_FEATURES)
    assert jnp.allclose(out, ref, atol=1e-4, rtol=1e-4)

    print("KERNEL_OK")
</pallas_src>

<mosaic_0001>
module attributes {stable_mosaic.version = 11 : i64} {
  func.func @gelu_linear_kernel(%arg0: i32, %arg1: memref<196x512xf32, #tpu.memory_space<vmem>>, %arg2: memref<512x384xf32, #tpu.memory_space<vmem>>, %arg3: memref<1x384xf32, #tpu.memory_space<vmem>>, %arg4: memref<196x384xf32, #tpu.memory_space<vmem>>) attributes {dimension_semantics = [#tpu.dimension_semantics<arbitrary>], iteration_bounds = array<i64: 3>, scalar_prefetch = 0 : i64, scratch_operands = 0 : i64, tpu.core_type = #tpu.core_type<tc>, window_params = [{transform_indices = @transform_0, window_bounds = array<i64: 196, 512>}, {transform_indices = @transform_1, window_bounds = array<i64: 512, 384>}, {pipeline_mode = #tpu.pipeline_mode<synchronous>, transform_indices = @transform_2, window_bounds = array<i64: 1, 384>}, {pipeline_mode = #tpu.pipeline_mode<synchronous>, transform_indices = @transform_3, window_bounds = array<i64: 196, 384>}]} {
    %c0_i32 = arith.constant 0 : i32
    %0 = arith.cmpi eq, %arg0, %c0_i32 : i32
    %1 = arith.extui %0 : i1 to i32
    %c0_i32_0 = arith.constant 0 : i32
    %2 = arith.cmpi ne, %1, %c0_i32_0 : i32
    scf.if %2 {
      %c0_11 = arith.constant 0 : index
      %c0_12 = arith.constant 0 : index
      %17 = vector.load %arg3[%c0_11, %c0_12] : memref<1x384xf32, #tpu.memory_space<vmem>>, vector<1x384xf32>
      %18 = vector.shape_cast %17 : vector<1x384xf32> to vector<1x384xf32>
      %19 = vector.broadcast %18 : vector<1x384xf32> to vector<196x384xf32>
      %c0_13 = arith.constant 0 : index
      %c0_14 = arith.constant 0 : index
      %20 = vector.load %arg4[%c0_13, %c0_14] : memref<196x384xf32, #tpu.memory_space<vmem>>, vector<196x384xf32>
      tpu.vector_store %arg4[%c0_13, %c0_14], %19 {strides = array<i32>} : memref<196x384xf32, #tpu.memory_space<vmem>>, vector<196x384xf32>,
    } else {
    }
    %c0 = arith.constant 0 : index
    %c0_1 = arith.constant 0 : index
    %3 = vector.load %arg1[%c0, %c0_1] : memref<196x512xf32, #tpu.memory_space<vmem>>, vector<196x512xf32>
    %cst = arith.constant 5.000000e-01 : f32
    %4 = vector.broadcast %cst : f32 to vector<196x512xf32>
    %5 = arith.mulf %4, %3 : vector<196x512xf32>
    %cst_2 = arith.constant 0.707106769 : f32
    %6 = vector.broadcast %cst_2 : f32 to vector<196x512xf32>
    %7 = arith.mulf %3, %6 : vector<196x512xf32>
    %8 = math.erf %7 : vector<196x512xf32>
    %cst_3 = arith.constant 1.000000e+00 : f32
    %9 = vector.broadcast %cst_3 : f32 to vector<196x512xf32>
    %10 = arith.addf %9, %8 : vector<196x512xf32>
    %11 = arith.mulf %5, %10 : vector<196x512xf32>
    %c0_4 = arith.constant 0 : index
    %c0_5 = arith.constant 0 : index
    %12 = vector.load %arg4[%c0_4, %c0_5] : memref<196x384xf32, #tpu.memory_space<vmem>>, vector<196x384xf32>
    %c0_6 = arith.constant 0 : index
    %c0_7 = arith.constant 0 : index
    %13 = vector.load %arg2[%c0_6, %c0_7] : memref<512x384xf32, #tpu.memory_space<vmem>>, vector<512x384xf32>
    %cst_8 = arith.constant dense<0.000000e+00> : vector<196x384xf32>
    %14 = tpu.matmul %11, %13, %cst_8 {dimension_numbers = #tpu.dot_dimension_numbers<[1], [0], [0], [1], [0, 0, 1, 1], [], []>} : vector<196x512xf32>, vector<512x384xf32>, vector<196x384xf32> -> vector<196x384xf32>
    %15 = arith.addf %12, %14 : vector<196x384xf32>
    %c0_9 = arith.constant 0 : index
    %c0_10 = arith.constant 0 : index
    %16 = vector.load %arg4[%c0_9, %c0_10] : memref<196x384xf32, #tpu.memory_space<vmem>>, vector<196x384xf32>
    tpu.vector_store %arg4[%c0_9, %c0_10], %15 {strides = array<i32>} : memref<196x384xf32, #tpu.memory_space<vmem>>, vector<196x384xf32>,
    return
  }
  func.func @transform_0(%arg0: i32) -> (i32, i32) {
    %c0_i32 = arith.constant 0 : i32
    %c0_i32_0 = arith.constant 0 : i32
    return %c0_i32, %arg0 : i32, i32
  }
  func.func @transform_1(%arg0: i32) -> (i32, i32) {
    %c0_i32 = arith.constant 0 : i32
    %c0_i32_0 = arith.constant 0 : i32
    return %arg0, %c0_i32 : i32, i32
  }
  func.func @transform_2(%arg0: i32) -> (i32, i32) {
    %c0_i32 = arith.constant 0 : i32
    %c0_i32_0 = arith.constant 0 : i32
    %c0_i32_1 = arith.constant 0 : i32
    return %c0_i32, %c0_i32_0 : i32, i32
  }
  func.func @transform_3(%arg0: i32) -> (i32, i32) {
    %c0_i32 = arith.constant 0 : i32
    %c0_i32_0 = arith.constant 0 : i32
    %c0_i32_1 = arith.constant 0 : i32
    return %c0_i32, %c0_i32_0 : i32, i32
  }
}

</mosaic_0001>

<llo_original>
// kernel: tpu_custom_call.1
$region0: #{tpu_custom_call.1}
  #allocation0 [shape = 'u32[]', space=smem, size = 0x4, offset = 0x4, fixed_abs, tag = 'smem constant byte address 0x4 - core index']
  #allocation1 [shape = 'u32[144,128]{1,0:T(1,128)}', space=vmem, size = 0x12000, scoped, tag = 'internal scratch']
  %s0 = inlined_call_operand.hbm [shape: f32[196,1536], index: 0, kind: input, shape index: {}]
  %s1 = inlined_call_operand.hbm [shape: f32[1536,384], index: 1, kind: input, shape index: {}]
  %s2 = inlined_call_operand.hbm [shape: f32[1,384], index: 2, kind: input, shape index: {}]
  %s3 = inlined_call_operand.hbm [shape: f32[196,384], index: 3, kind: output, shape index: {}]
  %s4 = sld [smem:[#allocation0]]
  $region61: #{tpu_custom_call.1} parent=0
    _
  %s6 = ssub.s32 1, %s4
  %s7 = scalar_select 0, %s6, %s4
  $region1: #{tpu_custom_call.1} parent=0
    #allocation2 [shape = 'u8[819200]{0}', space=vmem, size = 0xc8000, scoped, tag = 'input window, operand 0']
    #allocation3 [shape = 's32[2]{0}', space=sflag, size = 0x8, scoped, tag = 'scoped memory for tpu_custom_call.1']
    #allocation4 [shape = 's32[2]{0}', space=sflag, size = 0x8, scoped, tag = 'scoped memory for tpu_custom_call.1']
    #allocation5 [shape = 'u8[1572864]{0}', space=vmem, size = 0x180000, scoped, tag = 'input window, operand 1']
    #allocation6 [shape = 's32[2]{0}', space=sflag, size = 0x8, scoped, tag = 'scoped memory for tpu_custom_call.1']
    #allocation7 [shape = 'u8[1536]{0}', space=vmem, size = 0x800, scoped, tag = 'input window, operand 2, single buffered']
    #allocation8 [shape = 'u8[307200]{0}', space=vmem, size = 0x4b000, scoped, tag = 'output window, operand 0, single buffered']
    %8 = vsyncpa [#allocation3], 0
    %s9 = scalar_lea.sflag [#allocation3], 1
    %10 = vsyncpa %s9, 0
    %11 = vsyncpa [#allocation6], 0
    %s12 = scalar_lea.sflag [#allocation6], 1
    %13 = vsyncpa %s12, 0
    %14 = vsyncpa [#allocation4], 0
    loop: start=0, step=1, limit=5
    $region2: #{tpu_custom_call.1} parent=1 // loop_pre_header
      _
    $region3: #{tpu_custom_call.1} parent=1 // loop_header
      %s16 = sphi 0, %s20
      %p17 = scmp.ge.s32.totalorder %s16, 5
      %s26 = sphi 0, %s28
      %s29 = sphi 0, %s26
      %s30 = sphi 0, %s29
      %s46 = sphi 0, %s30
      %s52 = sphi 0, %s54
      %s55 = sphi 0, %s52
      %s56 = sphi 0, %s55
      %s72 = sphi 0, %s56
      %s76 = sphi 0, %s76
      %s78 = sphi 0, %s76
      %s79 = sphi 0, %s78
      %s93 = sphi 0, %s79
      %s97 = sphi 0, %s97
      %s99 = sphi 0, %s97
      %s100 = sphi 0, %s99
      %s114 = sphi 0, %s100
    $region4: #{tpu_custom_call.1} parent=1 // loop_header_branch
      %19 = sbr.rel (%p17) target = $region8
    $region5: #{tpu_custom_call.1} parent=1 // loop_body
      %s21 = ssub.s32 %s16, 1
      %s22 = ssub.s32 %s16, 2
      %s23 = sadd.s32 %s16, 1
      %s24 = ssub.s32 %s16, %s23
      %p25 = scmp.eq.s32.totalorder %s24, 0
      %s27 = sadd.s32 %s26, 1
      %s28 = scalar_select %p25, %s26, %s27
      %p31 = pneg %p25
      %p32 = scmp.eq.s32.totalorder %s16, 2
      %p33 = por %p31, %p32
      %p34 = scmp.ne.s32.totalorder %s26, %s29
      %p35 = scmp.eq.s32.totalorder %s16, 0
      %p36 = por %p34, %p35
      %p37 = scmp.ne.s32.totalorder %s26, %s29
      %p38 = scmp.eq.s32.totalorder %s21, 2
      %p39 = por %p37, %p38
      %p40 = scmp.ne.s32.totalorder %s29, %s30
      %p41 = scmp.eq.s32.totalorder %s21, 0
      %p42 = por %p40, %p41
      %p43 = scmp.ne.s32.totalorder %s29, %s30
      %p44 = scmp.eq.s32.totalorder %s22, 2
      %p45 = por %p43, %p44
      %p47 = scmp.ne.s32.totalorder %s30, %s46
      %p48 = scmp.eq.s32.totalorder %s22, 0
      %p49 = por %p47, %p48
      %s50 = ssub.s32 %s16, %s23
      %p51 = scmp.eq.s32.totalorder %s50, 0
      %s53 = sadd.s32 %s52, 1
      %s54 = scalar_select %p51, %s52, %s53
      %p57 = pneg %p51
      %p58 = scmp.eq.s32.totalorder %s16, 2
      %p59 = por %p57, %p58
      %p60 = scmp.ne.s32.totalorder %s52, %s55
      %p61 = scmp.eq.s32.totalorder %s16, 0
      %p62 = por %p60, %p61
      %p63 = scmp.ne.s32.totalorder %s52, %s55
      %p64 = scmp.eq.s32.totalorder %s21, 2
      %p65 = por %p63, %p64
      %p66 = scmp.ne.s32.totalorder %s55, %s56
      %p67 = scmp.eq.s32.totalorder %s21, 0
      %p68 = por %p66, %p67
      %p69 = scmp.ne.s32.totalorder %s55, %s56
      %p70 = scmp.eq.s32.totalorder %s22, 2
      %p71 = por %p69, %p70
      %p73 = scmp.ne.s32.totalorder %s56, %s72
      %p74 = scmp.eq.s32.totalorder %s22, 0
      %p75 = por %p73, %p74
      %s77 = sadd.s32 %s76, 1
      %p80 = scmp.eq.s32.totalorder %s16, 2
      %p81 = scmp.ne.s32.totalorder %s76, %s78
      %p82 = scmp.eq.s32.totalorder %s16, 0
      %p83 = por %p81, %p82
      %p84 = scmp.ne.s32.totalorder %s76, %s78
      %p85 = scmp.eq.s32.totalorder %s21, 2
      %p86 = por %p84, %p85
      %p87 = scmp.ne.s32.totalorder %s78, %s79
      %p88 = scmp.eq.s32.totalorder %s21, 0
      %p89 = por %p87, %p88
      %p90 = scmp.ne.s32.totalorder %s78, %s79
      %p91 = scmp.eq.s32.totalorder %s22, 2
      %p92 = por %p90, %p91
      %p94 = scmp.ne.s32.totalorder %s79, %s93
      %p95 = scmp.eq.s32.totalorder %s22, 0
      %p96 = por %p94, %p95
      %s98 = sadd.s32 %s97, 1
      %p101 = scmp.eq.s32.totalorder %s16, 2
      %p102 = scmp.ne.s32.totalorder %s97, %s99
      %p103 = scmp.eq.s32.totalorder %s16, 0
      %p104 = por %p102, %p103
      %p105 = scmp.ne.s32.totalorder %s97, %s99
      %p106 = scmp.eq.s32.totalorder %s21, 2
      %p107 = por %p105, %p106
      %p108 = scmp.ne.s32.totalorder %s99, %s100
      %p109 = scmp.eq.s32.totalorder %s21, 0
      %p110 = por %p108, %p109
      %p111 = scmp.ne.s32.totalorder %s99, %s100
      %p112 = scmp.eq.s32.totalorder %s22, 2
      %p113 = por %p111, %p112
      %p115 = scmp.ne.s32.totalorder %s100, %s114
      %p116 = scmp.eq.s32.totalorder %s22, 0
      %p117 = por %p115, %p116
      %p118 = scmp.le.s32.totalorder 1, %s16
      %p119 = scmp.lt.s32.totalorder %s16, 4
      %p120 = pnand %p118, %p119
      %p121 = pneg %p120
      // Predicated region
      $region9: #{tpu_custom_call.1} parent=5 // pred_check
        _
      $region10: #{tpu_custom_call.1} parent=5 // pred_check_branch
        %123 = sbr.rel (%p120) target = $region12
      $region11: #{tpu_custom_call.1} parent=5 // pred_region
        %s124 = ssub.s32 %s16, 1
        // Predicated region
        $region13: #{tpu_custom_call.1} parent=11 // pred_check
          %p125 = pneg %p89
        $region14: #{tpu_custom_call.1} parent=11 // pred_check_branch
          %127 = sbr.rel (%p125) target = $region16
        $region15: #{tpu_custom_call.1} parent=11 // pred_region
          %s129 = ssub.s32 48, 48
          %130 = vsyncadd [#allocation6], %s129
          %s132 = sshll.u32 [#allocation7], 4
          %s133 = int_to_ptr.vmem [resolvable:$true] %s132
          %135 = dma.hbm_to_vmem [thread:$0]  %s2, 48, %s133, [#allocation6]
        $region16: #{tpu_custom_call.1} parent=11 // pred_fallthru
          _
      $region12: #{tpu_custom_call.1} parent=5 // pred_fallthru
        _
      %p136 = scmp.lt.s32.totalorder %s16, 3
      // Predicated region
      $region17: #{tpu_custom_call.1} parent=5 // pred_check
        %p137 = pneg %p136
      $region18: #{tpu_custom_call.1} parent=5 // pred_check_branch
        %139 = sbr.rel (%p137) target = $region20
      $region19: #{tpu_custom_call.1} parent=5 // pred_region
        // Predicated region
        $region21: #{tpu_custom_call.1} parent=19 // pred_check
          %p140 = pneg %p36
        $region22: #{tpu_custom_call.1} parent=19 // pred_check_branch
          %142 = sbr.rel (%p140) target = $region24
        $region23: #{tpu_custom_call.1} parent=19 // pred_region
          %s143 = sand.u32 %s26, 1
          %s144 = scalar_lea.sflag [#allocation3], %s143
          %s145 = sand.u32 %s26, 1
          %s146 = smul.addr %s145, 800
          %s147 = scalar_lea.vmem [#allocation2], %s146
          %s148 = smul.u32 4, %s16
          %s150 = ssub.s32 12800, 12800
          %151 = vsyncadd %s144, %s150
          %s152 = smul.addr %s148, 128
          %s153 = scalar_lea.hbm %s0, %s152
          %s154 = sshll.u32 %s147, 4
          %s155 = int_to_ptr.vmem [resolvable:$true] %s154
          %160 = dma.hbm_to_vmem [thread:$0]  %s153, 12800, %s155, %s144, 1536, 512, 32
        $region24: #{tpu_custom_call.1} parent=19 // pred_fallthru
          _
        // Predicated region
        $region25: #{tpu_custom_call.1} parent=19 // pred_check
          %p161 = pneg %p62
        $region26: #{tpu_custom_call.1} parent=19 // pred_check_branch
          %163 = sbr.rel (%p161) target = $region28
        $region27: #{tpu_custom_call.1} parent=19 // pred_region
          %s164 = sand.u32 %s16, 1
          %s165 = scalar_lea.sflag [#allocation6], %s164
          %s166 = sand.u32 %s52, 1
          %s167 = smul.addr %s166, 1536
          %s168 = scalar_lea.vmem [#allocation5], %s167
          %s169 = smul.u32 64, %s16
          %s171 = ssub.s32 24576, 24576
          %172 = vsyncadd %s165, %s171
          %s173 = smul.addr %s169, 3
          %s174 = smul.addr %s173, 128
          %s175 = scalar_lea.hbm %s1, %s174
          %s176 = sshll.u32 %s168, 4
          %s177 = int_to_ptr.vmem [resolvable:$true] %s176
          %182 = dma.hbm_to_vmem [thread:$0]  %s175, 24576, %s177, %s165, 384, 384, 24
        $region28: #{tpu_custom_call.1} parent=19 // pred_fallthru
          _
      $region20: #{tpu_custom_call.1} parent=5 // pred_fallthru
        _
      %p183 = scmp.le.s32.totalorder 1, %s16
      %p184 = scmp.lt.s32.totalorder %s16, 4
      %p185 = pnand %p183, %p184
      %p186 = pneg %p185
      // Predicated region
      $region29: #{tpu_custom_call.1} parent=5 // pred_check
        _
      $region30: #{tpu_custom_call.1} parent=5 // pred_check_branch
        %188 = sbr.rel (%p185) target = $region32
      $region31: #{tpu_custom_call.1} parent=5 // pred_region
        %s189 = ssub.s32 %s16, 1
        %s190 = sand.u32 %s29, 1
        %s191 = scalar_lea.sflag [#allocation3], %s190
        %s192 = sand.u32 %s29, 1
        %s193 = smul.addr %s192, 800
        %s194 = scalar_lea.vmem [#allocation2], %s193
        // Predicated region
        $region33: #{tpu_custom_call.1} parent=31 // pred_check
          %p195 = pneg %p42
        $region34: #{tpu_custom_call.1} parent=31 // pred_check_branch
          %197 = sbr.rel (%p195) target = $region36
        $region35: #{tpu_custom_call.1} parent=31 // pred_region
          %198 = dma.done %s191, 12800
        $region36: #{tpu_custom_call.1} parent=31 // pred_fallthru
          _
        %s199 = sand.u32 %s21, 1
        %s200 = scalar_lea.sflag [#allocation6], %s199
        %s201 = sand.u32 %s55, 1
        %s202 = smul.addr %s201, 1536
        %s203 = scalar_lea.vmem [#allocation5], %s202
        // Predicated region
        $region37: #{tpu_custom_call.1} parent=31 // pred_check
          %p204 = pneg %p68
        $region38: #{tpu_custom_call.1} parent=31 // pred_check_branch
          %206 = sbr.rel (%p204) target = $region40
        $region39: #{tpu_custom_call.1} parent=31 // pred_region
          %207 = dma.done %s200, 24576
        $region40: #{tpu_custom_call.1} parent=31 // pred_fallthru
          _
        // Predicated region
        $region41: #{tpu_custom_call.1} parent=31 // pred_check
          %p208 = pneg %p89
        $region42: #{tpu_custom_call.1} parent=31 // pred_check_branch
          %210 = sbr.rel (%p208) target = $region44
        $region43: #{tpu_custom_call.1} parent=31 // pred_region
          %211 = dma.done [#allocation6], 48
        $region44: #{tpu_custom_call.1} parent=31 // pred_fallthru
          _
        %s212 = sand.u32 %s29, 1
        %s213 = scalar_lea.sflag [#allocation3], %s212
        %s214 = sand.u32 %s29, 1
        %s215 = smul.addr %s214, 800
        %s216 = scalar_lea.vmem [#allocation2], %s215
        %p217 = pneg %p42
        %p218 = pneg %p39
        %s219 = sand.u32 %s21, 1
        %s220 = scalar_lea.sflag [#allocation6], %s219
        %s221 = sand.u32 %s55, 1
        %s222 = smul.addr %s221, 1536
        %s223 = scalar_lea.vmem [#allocation5], %s222
        %p224 = pneg %p68
        %p225 = pneg %p65
        %p226 = pneg %p89
        %p227 = pneg %p86
        %p228 = pneg %p110
        %p229 = pneg %p107
        %s230 = smul.u32 4, %s21
        %s231 = smul.u32 64, %s21
        %p232 = scmp.eq.s32.totalorder %s21, 0
        // Predicated region
        $region45: #{tpu_custom_call.1} parent=31 // pred_check
          %p233 = pneg %p232
        $region46: #{tpu_custom_call.1} parent=31 // pred_check_branch
          %235 = sbr.rel (%p233) target = $region48
        $region47: #{tpu_custom_call.1} parent=31 // pred_region
          %v236 = vld [vmem:[#allocation7] sm:$0x7]
          %v238 = vlaneseq
          %v239 = vshrl.u32 %v238, 7
          %v240 = vsub.s32 0, %v239
          %v241 = vrot.slane %v236, %v240
          %v242 = vlaneseq
          %v243 = vshrl.u32 %v242, 7
          %v244 = vsub.s32 1, %v243
          %v245 = vrot.slane %v236, %v244
          %v246 = vlaneseq
          %v247 = vshrl.u32 %v246, 7
          %v248 = vsub.s32 2, %v247
          %v249 = vrot.slane %v236, %v248
          %253 = vst [vmem:[#allocation8] sm:$0xff] %v241
          %254 = vst [vmem:[#allocation8 + $0x8] sm:$0xff] %v245
          %255 = vst [vmem:[#allocation8 + $0x10] sm:$0xff] %v249
          %256 = vst [vmem:[#allocation8 + $0x18] sm:$0xff] %v241
          %257 = vst [vmem:[#allocation8 + $0x20] sm:$0xff] %v245
          %258 = vst [vmem:[#allocation8 + $0x28] sm:$0xff] %v249
          %259 = vst [vmem:[#allocation8 + $0x30] sm:$0xff] %v241
          %260 = vst [vmem:[#allocation8 + $0x38] sm:$0xff] %v245
          %261 = vst [vmem:[#allocation8 + $0x40] sm:$0xff] %v249
          %262 = vst [vmem:[#allocation8 + $0x48] sm:$0xff] %v241
          %263 = vst [vmem:[#allocation8 + $0x50] sm:$0xff] %v245
          %264 = vst [vmem:[#allocation8 + $0x58] sm:$0xff] %v249
          %265 = vst [vmem:[#allocation8 + $0x60] sm:$0xff] %v241
          %266 = vst [vmem:[#allocation8 + $0x68] sm:$0xff] %v245
          %267 = vst [vmem:[#allocation8 + $0x70] sm:$0xff] %v249
          %268 = vst [vmem:[#allocation8 + $0x78] sm:$0xff] %v241
          %269 = vst [vmem:[#allocation8 + $0x80] sm:$0xff] %v245
          %270 = vst [vmem:[#allocation8 + $0x88] sm:$0xff] %v249
          %271 = vst [vmem:[#allocation8 + $0x90] sm:$0xff] %v241
          %272 = vst [vmem:[#allocation8 + $0x98] sm:$0xff] %v245
          %273 = vst [vmem:[#allocation8 + $0xa0] sm:$0xff] %v249
          %274 = vst [vmem:[#allocation8 + $0xa8] sm:$0xff] %v241
          %275 = vst [vmem:[#allocation8 + $0xb0] sm:$0xff] %v245
          %276 = vst [vmem:[#allocation8 + $0xb8] sm:$0xff] %v249
          %277 = vst [vmem:[#allocation8 + $0xc0] sm:$0xff] %v241
          %278 = vst [vmem:[#allocation8 + $0xc8] sm:$0xff] %v245
          %279 = vst [vmem:[#allocation8 + $0xd0] sm:$0xff] %v249
          %280 = vst [vmem:[#allocation8 + $0xd8] sm:$0xff] %v241
          %281 = vst [vmem:[#allocation8 + $0xe0] sm:$0xff] %v245
          %282 = vst [vmem:[#allocation8 + $0xe8] sm:$0xff] %v249
          %283 = vst [vmem:[#allocation8 + $0xf0] sm:$0xff] %v241
          %284 = vst [vmem:[#allocation8 + $0xf8] sm:$0xff] %v245
          %285 = vst [vmem:[#allocation8 + $0x100] sm:$0xff] %v249
          %286 = vst [vmem:[#allocation8 + $0x108] sm:$0xff] %v241
          %287 = vst [vmem:[#allocation8 + $0x110] sm:$0xff] %v245
          %288 = vst [vmem:[#allocation8 + $0x118] sm:$0xff] %v249
          %289 = vst [vmem:[#allocation8 + $0x120] sm:$0xff] %v241
          %290 = vst [vmem:[#allocation8 + $0x128] sm:$0xff] %v245
          %291 = vst [vmem:[#allocation8 + $0x130] sm:$0xff] %v249
          %292 = vst [vmem:[#allocation8 + $0x138] sm:$0xff] %v241
          %293 = vst [vmem:[#allocation8 + $0x140] sm:$0xff] %v245
          %294 = vst [vmem:[#allocation8 + $0x148] sm:$0xff] %v249
          %295 = vst [vmem:[#allocation8 + $0x150] sm:$0xff] %v241
          %296 = vst [vmem:[#allocation8 + $0x158] sm:$0xff] %v245
          %297 = vst [vmem:[#allocation8 + $0x160] sm:$0xff] %v249
          %298 = vst [vmem:[#allocation8 + $0x168] sm:$0xff] %v241
          %299 = vst [vmem:[#allocation8 + $0x170] sm:$0xff] %v245
          %300 = vst [vmem:[#allocation8 + $0x178] sm:$0xff] %v249
          %301 = vst [vmem:[#allocation8 + $0x180] sm:$0xff] %v241
          %302 = vst [vmem:[#allocation8 + $0x188] sm:$0xff] %v245
          %303 = vst [vmem:[#allocation8 + $0x190] sm:$0xff] %v249
          %304 = vst [vmem:[#allocation8 + $0x198] sm:$0xff] %v241
          %305 = vst [vmem:[#allocation8 + $0x1a0] sm:$0xff] %v245
          %306 = vst [vmem:[#allocation8 + $0x1a8] sm:$0xff] %v249
          %307 = vst [vmem:[#allocation8 + $0x1b0] sm:$0xff] %v241
          %308 = vst [vmem:[#allocation8 + $0x1b8] sm:$0xff] %v245
          %309 = vst [vmem:[#allocation8 + $0x1c0] sm:$0xff] %v249
          %310 = vst [vmem:[#allocation8 + $0x1c8] sm:$0xff] %v241
          %311 = vst [vmem:[#allocation8 + $0x1d0] sm:$0xff] %v245
          %312 = vst [vmem:[#allocation8 + $0x1d8] sm:$0xff] %v249
          %313 = vst [vmem:[#allocation8 + $0x1e0] sm:$0xff] %v241
          %314 = vst [vmem:[#allocation8 + $0x1e8] sm:$0xff] %v245
          %315 = vst [vmem:[#allocation8 + $0x1f0] sm:$0xff] %v249
          %316 = vst [vmem:[#allocation8 + $0x1f8] sm:$0xff] %v241
          %317 = vst [vmem:[#allocation8 + $0x200] sm:$0xff] %v245
          %318 = vst [vmem:[#allocation8 + $0x208] sm:$0xff] %v249
          %319 = vst [vmem:[#allocation8 + $0x210] sm:$0xff] %v241
          %320 = vst [vmem:[#allocation8 + $0x218] sm:$0xff] %v245
          %321 = vst [vmem:[#allocation8 + $0x220] sm:$0xff] %v249
          %322 = vst [vmem:[#allocation8 + $0x228] sm:$0xff] %v241
          %323 = vst [vmem:[#allocation8 + $0x230] sm:$0xff] %v245
          %324 = vst [vmem:[#allocation8 + $0x238] sm:$0xff] %v249
          %325 = vst [vmem:[#allocation8 + $0x240] sm:$0xf] %v241
          %326 = vst [vmem:[#allocation8 + $0x248] sm:$0xf] %v245
          %327 = vst [vmem:[#allocation8 + $0x250] sm:$0xf] %v249
        $region48: #{tpu_custom_call.1} parent=31 // pred_fallthru
          _
        %v328 = vld [vmem:[%s194] sm:$0xff]
        %v329 = vld [vmem:[%s194 + $0x8] sm:$0xff]
        %v330 = vld [vmem:[%s194 + $0x10] sm:$0xff]
        %v331 = vld [vmem:[%s194 + $0x18] sm:$0xff]
        %v332 = vld [vmem:[%s194 + $0x20] sm:$0xff]
        %v333 = vld [vmem:[%s194 + $0x28] sm:$0xff]
        %v334 = vld [vmem:[%s194 + $0x30] sm:$0xff]
        %v335 = vld [vmem:[%s194 + $0x38] sm:$0xff]
        %v336 = vld [vmem:[%s194 + $0x40] sm:$0xff]
        %v337 = vld [vmem:[%s194 + $0x48] sm:$0xff]
        %v338 = vld [vmem:[%s194 + $0x50] sm:$0xff]
        %v339 = vld [vmem:[%s194 + $0x58] sm:$0xff]
        %v340 = vld [vmem:[%s194 + $0x60] sm:$0xff]
        %v341 = vld [vmem:[%s194 + $0x68] sm:$0xff]
        %v342 = vld [vmem:[%s194 + $0x70] sm:$0xff]
        %v343 = vld [vmem:[%s194 + $0x78] sm:$0xff]
        %v344 = vld [vmem:[%s194 + $0x80] sm:$0xff]
        %v345 = vld [vmem:[%s194 + $0x88] sm:$0xff]
        %v346 = vld [vmem:[%s194 + $0x90] sm:$0xff]
        %v347 = vld [vmem:[%s194 + $0x98] sm:$0xff]
        %v348 = vld [vmem:[%s194 + $0xa0] sm:$0xff]
        %v349 = vld [vmem:[%s194 + $0xa8] sm:$0xff]
        %v350 = vld [vmem:[%s194 + $0xb0] sm:$0xff]
        %v351 = vld [vmem:[%s194 + $0xb8] sm:$0xff]
        %v352 = vld [vmem:[%s194 + $0xc0] sm:$0xff]
        %v353 = vld [vmem:[%s194 + $0xc8] sm:$0xff]
        %v354 = vld [vmem:[%s194 + $0xd0] sm:$0xff]
        %v355 = vld [vmem:[%s194 + $0xd8] sm:$0xff]
        %v356 = vld [vmem:[%s194 + $0xe0] sm:$0xff]
        %v357 = vld [vmem:[%s194 + $0xe8] sm:$0xff]
        %v358 = vld [vmem:[%s194 + $0xf0] sm:$0xff]
        %v359 = vld [vmem:[%s194 + $0xf8] sm:$0xff]
        %v360 = vld [vmem:[%s194 + $0x100] sm:$0xff]
        %v361 = vld [vmem:[%s194 + $0x108] sm:$0xff]
        %v362 = vld [vmem:[%s194 + $0x110] sm:$0xff]
        %v363 = vld [vmem:[%s194 + $0x118] sm:$0xff]
        %v364 = vld [vmem:[%s194 + $0x120] sm:$0xff]
        %v365 = vld [vmem:[%s194 + $0x128] sm:$0xff]
        %v366 = vld [vmem:[%s194 + $0x130] sm:$0xff]
        %v367 = vld [vmem:[%s194 + $0x138] sm:$0xff]
        %v368 = vld [vmem:[%s194 + $0x140] sm:$0xff]
        %v369 = vld [vmem:[%s194 + $0x148] sm:$0xff]
        %v370 = vld [vmem:[%s194 + $0x150] sm:$0xff]
        %v371 = vld [vmem:[%s194 + $0x158] sm:$0xff]
        %v372 = vld [vmem:[%s194 + $0x160] sm:$0xff]
        %v373 = vld [vmem:[%s194 + $0x168] sm:$0xff]
        %v374 = vld [vmem:[%s194 + $0x170] sm:$0xff]
        %v375 = vld [vmem:[%s194 + $0x178] sm:$0xff]
        %v376 = vld [vmem:[%s194 + $0x180] sm:$0xff]
        %v377 = vld [vmem:[%s194 + $0x188] sm:$0xff]
        %v378 = vld [vmem:[%s194 + $0x190] sm:$0xff]
        %v379 = vld [vmem:[%s194 + $0x198] sm:$0xff]
        %v380 = vld [vmem:[%s194 + $0x1a0] sm:$0xff]
        %v381 = vld [vmem:[%s194 + $0x1a8] sm:$0xff]
        %v382 = vld [vmem:[%s194 + $0x1b0] sm:$0xff]
        %v383 = vld [vmem:[%s194 + $0x1b8] sm:$0xff]
        %v384 = vld [vmem:[%s194 + $0x1c0] sm:$0xff]
        %v385 = vld [vmem:[%s194 + $0x1c8] sm:$0xff]
        %v386 = vld [vmem:[%s194 + $0x1d0] sm:$0xff]
        %v387 = vld [vmem:[%s194 + $0x1d8] sm:$0xff]
        %v388 = vld [vmem:[%s194 + $0x1e0] sm:$0xff]
        %v389 = vld [vmem:[%s194 + $0x1e8] sm:$0xff]
        %v390 = vld [vmem:[%s194 + $0x1f0] sm:$0xff]
        %v391 = vld [vmem:[%s194 + $0x1f8] sm:$0xff]
        %v392 = vld [vmem:[%s194 + $0x200] sm:$0xff]
        %v393 = vld [vmem:[%s194 + $0x208] sm:$0xff]
        %v394 = vld [vmem:[%s194 + $0x210] sm:$0xff]
        %v395 = vld [vmem:[%s194 + $0x218] sm:$0xff]
        %v396 = vld [vmem:[%s194 + $0x220] sm:$0xff]
        %v397 = vld [vmem:[%s194 + $0x228] sm:$0xff]
        %v398 = vld [vmem:[%s194 + $0x230] sm:$0xff]
        %v399 = vld [vmem:[%s194 + $0x238] sm:$0xff]
        %v400 = vld [vmem:[%s194 + $0x240] sm:$0xff]
        %v401 = vld [vmem:[%s194 + $0x248] sm:$0xff]
        %v402 = vld [vmem:[%s194 + $0x250] sm:$0xff]
        %v403 = vld [vmem:[%s194 + $0x258] sm:$0xff]
        %v404 = vld [vmem:[%s194 + $0x260] sm:$0xff]
        %v405 = vld [vmem:[%s194 + $0x268] sm:$0xff]
        %v406 = vld [vmem:[%s194 + $0x270] sm:$0xff]
        %v407 = vld [vmem:[%s194 + $0x278] sm:$0xff]
        %v408 = vld [vmem:[%s194 + $0x280] sm:$0xff]
        %v409 = vld [vmem:[%s194 + $0x288] sm:$0xff]
        %v410 = vld [vmem:[%s194 + $0x290] sm:$0xff]
        %v411 = vld [vmem:[%s194 + $0x298] sm:$0xff]
        %v412 = vld [vmem:[%s194 + $0x2a0] sm:$0xff]
        %v413 = vld [vmem:[%s194 + $0x2a8] sm:$0xff]
        %v414 = vld [vmem:[%s194 + $0x2b0] sm:$0xff]
        %v415 = vld [vmem:[%s194 + $0x2b8] sm:$0xff]
        %v416 = vld [vmem:[%s194 + $0x2c0] sm:$0xff]
        %v417 = vld [vmem:[%s194 + $0x2c8] sm:$0xff]
        %v418 = vld [vmem:[%s194 + $0x2d0] sm:$0xff]
        %v419 = vld [vmem:[%s194 + $0x2d8] sm:$0xff]
        %v420 = vld [vmem:[%s194 + $0x2e0] sm:$0xff]
        %v421 = vld [vmem:[%s194 + $0x2e8] sm:$0xff]
        %v422 = vld [vmem:[%s194 + $0x2f0] sm:$0xff]
        %v423 = vld [vmem:[%s194 + $0x2f8] sm:$0xff]
        %v424 = vld [vmem:[%s194 + $0x300] sm:$0xf]
        %v425 = vld [vmem:[%s194 + $0x308] sm:$0xf]
        %v426 = vld [vmem:[%s194 + $0x310] sm:$0xf]
        %v427 = vld [vmem:[%s194 + $0x318] sm:$0xf]
        %v428 = vmul.f32 %v328, 0.5
        %v429 = vmul.f32 %v329, 0.5
        %v430 = vmul.f32 %v330, 0.5
        %v431 = vmul.f32 %v331, 0.5
        %v432 = vmul.f32 %v332, 0.5
        %v433 = vmul.f32 %v333, 0.5
        %v434 = vmul.f32 %v334, 0.5
        %v435 = vmul.f32 %v335, 0.5
        %v436 = vmul.f32 %v336, 0.5
        %v437 = vmul.f32 %v337, 0.5
        %v438 = vmul.f32 %v338, 0.5
        %v439 = vmul.f32 %v339, 0.5
        %v440 = vmul.f32 %v340, 0.5
        %v441 = vmul.f32 %v341, 0.5
        %v442 = vmul.f32 %v342, 0.5
        %v443 = vmul.f32 %v343, 0.5
        %v444 = vmul.f32 %v344, 0.5
        %v445 = vmul.f32 %v345, 0.5
        %v446 = vmul.f32 %v346, 0.5
        %v447 = vmul.f32 %v347, 0.5
        %v448 = vmul.f32 %v348, 0.5
        %v449 = vmul.f32 %v349, 0.5
        %v450 = vmul.f32 %v350, 0.5
        %v451 = vmul.f32 %v351, 0.5
        %v452 = vmul.f32 %v352, 0.5
        %v453 = vmul.f32 %v353, 0.5
        %v454 = vmul.f32 %v354, 0.5
        %v455 = vmul.f32 %v355, 0.5
        %v456 = vmul.f32 %v356, 0.5
        %v457 = vmul.f32 %v357, 0.5
        %v458 = vmul.f32 %v358, 0.5
        %v459 = vmul.f32 %v359, 0.5
        %v460 = vmul.f32 %v360, 0.5
        %v461 = vmul.f32 %v361, 0.5
        %v462 = vmul.f32 %v362, 0.5
        %v463 = vmul.f32 %v363, 0.5
        %v464 = vmul.f32 %v364, 0.5
        %v465 = vmul.f32 %v365, 0.5
        %v466 = vmul.f32 %v366, 0.5
        %v467 = vmul.f32 %v367, 0.5
        %v468 = vmul.f32 %v368, 0.5
        %v469 = vmul.f32 %v369, 0.5
        %v470 = vmul.f32 %v370, 0.5
        %v471 = vmul.f32 %v371, 0.5
        %v472 = vmul.f32 %v372, 0.5
        %v473 = vmul.f32 %v373, 0.5
        %v474 = vmul.f32 %v374, 0.5
        %v475 = vmul.f32 %v375, 0.5
        %v476 = vmul.f32 %v376, 0.5
        %v477 = vmul.f32 %v377, 0.5
        %v478 = vmul.f32 %v378, 0.5
        %v479 = vmul.f32 %v379, 0.5
        %v480 = vmul.f32 %v380, 0.5
        %v481 = vmul.f32 %v381, 0.5
        %v482 = vmul.f32 %v382, 0.5
        %v483 = vmul.f32 %v383, 0.5
        %v484 = vmul.f32 %v384, 0.5
        %v485 = vmul.f32 %v385, 0.5
        %v486 = vmul.f32 %v386, 0.5
        %v487 = vmul.f32 %v387, 0.5
        %v488 = vmul.f32 %v388, 0.5
        %v489 = vmul.f32 %v389, 0.5
        %v490 = vmul.f32 %v390, 0.5
        %v491 = vmul.f32 %v391, 0.5
        %v492 = vmul.f32 %v392, 0.5
        %v493 = vmul.f32 %v393, 0.5
        %v494 = vmul.f32 %v394, 0.5
        %v495 = vmul.f32 %v395, 0.5
        %v496 = vmul.f32 %v396, 0.5
        %v497 = vmul.f32 %v397, 0.5
        %v498 = vmul.f32 %v398, 0.5
        %v499 = vmul.f32 %v399, 0.5
        %v500 = vmul.f32 %v400, 0.5
        %v501 = vmul.f32 %v401, 0.5
        %v502 = vmul.f32 %v402, 0.5
        %v503 = vmul.f32 %v403, 0.5
        %v504 = vmul.f32 %v404, 0.5
        %v505 = vmul.f32 %v405, 0.5
        %v506 = vmul.f32 %v406, 0.5
        %v507 = vmul.f32 %v407, 0.5
        %v508 = vmul.f32 %v408, 0.5
        %v509 = vmul.f32 %v409, 0.5
        %v510 = vmul.f32 %v410, 0.5
        %v511 = vmul.f32 %v411, 0.5
        %v512 = vmul.f32 %v412, 0.5
        %v513 = vmul.f32 %v413, 0.5
        %v514 = vmul.f32 %v414, 0.5
        %v515 = vmul.f32 %v415, 0.5
        %v516 = vmul.f32 %v416, 0.5
        %v517 = vmul.f32 %v417, 0.5
        %v518 = vmul.f32 %v418, 0.5
        %v519 = vmul.f32 %v419, 0.5
        %v520 = vmul.f32 %v420, 0.5
        %v521 = vmul.f32 %v421, 0.5
        %v522 = vmul.f32 %v422, 0.5
        %v523 = vmul.f32 %v423, 0.5
        %v524 = vmul.f32 %v424, 0.5
        %v525 = vmul.f32 %v425, 0.5
        %v526 = vmul.f32 %v426, 0.5
        %v527 = vmul.f32 %v427, 0.5
        %v528 = vmul.f32 %v328, 0.70710677
        %v529 = vmul.f32 %v329, 0.70710677
        %v530 = vmul.f32 %v330, 0.70710677
        %v531 = vmul.f32 %v331, 0.70710677
        %v532 = vmul.f32 %v332, 0.70710677
        %v533 = vmul.f32 %v333, 0.70710677
        %v534 = vmul.f32 %v334, 0.70710677
        %v535 = vmul.f32 %v335, 0.70710677
        %v536 = vmul.f32 %v336, 0.70710677
        %v537 = vmul.f32 %v337, 0.70710677
        %v538 = vmul.f32 %v338, 0.70710677
        %v539 = vmul.f32 %v339, 0.70710677
        %v540 = vmul.f32 %v340, 0.70710677
        %v541 = vmul.f32 %v341, 0.70710677
        %v542 = vmul.f32 %v342, 0.70710677
        %v543 = vmul.f32 %v343, 0.70710677
        %v544 = vmul.f32 %v344, 0.70710677
        %v545 = vmul.f32 %v345, 0.70710677
        %v546 = vmul.f32 %v346, 0.70710677
        %v547 = vmul.f32 %v347, 0.70710677
        %v548 = vmul.f32 %v348, 0.70710677
        %v549 = vmul.f32 %v349, 0.70710677
        %v550 = vmul.f32 %v350, 0.70710677
        %v551 = vmul.f32 %v351, 0.70710677
        %v552 = vmul.f32 %v352, 0.70710677
        %v553 = vmul.f32 %v353, 0.70710677
        %v554 = vmul.f32 %v354, 0.70710677
        %v555 = vmul.f32 %v355, 0.70710677
        %v556 = vmul.f32 %v356, 0.70710677
        %v557 = vmul.f32 %v357, 0.70710677
        %v558 = vmul.f32 %v358, 0.70710677
        %v559 = vmul.f32 %v359, 0.70710677
        %v560 = vmul.f32 %v360, 0.70710677
        %v561 = vmul.f32 %v361, 0.70710677
        %v562 = vmul.f32 %v362, 0.70710677
        %v563 = vmul.f32 %v363, 0.70710677
        %v564 = vmul.f32 %v364, 0.70710677
        %v565 = vmul.f32 %v365, 0.70710677
        %v566 = vmul.f32 %v366, 0.70710677
        %v567 = vmul.f32 %v367, 0.70710677
        %v568 = vmul.f32 %v368, 0.70710677
        %v569 = vmul.f32 %v369, 0.70710677
        %v570 = vmul.f32 %v370, 0.70710677
        %v571 = vmul.f32 %v371, 0.70710677
        %v572 = vmul.f32 %v372, 0.70710677
        %v573 = vmul.f32 %v373, 0.70710677
        %v574 = vmul.f32 %v374, 0.70710677
        %v575 = vmul.f32 %v375, 0.70710677
        %v576 = vmul.f32 %v376, 0.70710677
        %v577 = vmul.f32 %v377, 0.70710677
        %v578 = vmul.f32 %v378, 0.70710677
        %v579 = vmul.f32 %v379, 0.70710677
        %v580 = vmul.f32 %v380, 0.70710677
        %v581 = vmul.f32 %v381, 0.70710677
        %v582 = vmul.f32 %v382, 0.70710677
        %v583 = vmul.f32 %v383, 0.70710677
        %v584 = vmul.f32 %v384, 0.70710677
        %v585 = vmul.f32 %v385, 0.70710677
        %v586 = vmul.f32 %v386, 0.70710677
        %v587 = vmul.f32 %v387, 0.70710677
        %v588 = vmul.f32 %v388, 0.70710677
        %v589 = vmul.f32 %v389, 0.70710677
        %v590 = vmul.f32 %v390, 0.70710677
        %v591 = vmul.f32 %v391, 0.70710677
        %v592 = vmul.f32 %v392, 0.70710677
        %v593 = vmul.f32 %v393, 0.70710677
        %v594 = vmul.f32 %v394, 0.70710677
        %v595 = vmul.f32 %v395, 0.70710677
        %v596 = vmul.f32 %v396, 0.70710677
        %v597 = vmul.f32 %v397, 0.70710677
        %v598 = vmul.f32 %v398, 0.70710677
        %v599 = vmul.f32 %v399, 0.70710677
        %v600 = vmul.f32 %v400, 0.70710677
        %v601 = vmul.f32 %v401, 0.70710677
        %v602 = vmul.f32 %v402, 0.70710677
        %v603 = vmul.f32 %v403, 0.70710677
        %v604 = vmul.f32 %v404, 0.70710677
        %v605 = vmul.f32 %v405, 0.70710677
        %v606 = vmul.f32 %v406, 0.70710677
        %v607 = vmul.f32 %v407, 0.70710677
        %v608 = vmul.f32 %v408, 0.70710677
        %v609 = vmul.f32 %v409, 0.70710677
        %v610 = vmul.f32 %v410, 0.70710677
        %v611 = vmul.f32 %v411, 0.70710677
        %v612 = vmul.f32 %v412, 0.70710677
        %v613 = vmul.f32 %v413, 0.70710677
        %v614 = vmul.f32 %v414, 0.70710677
        %v615 = vmul.f32 %v415, 0.70710677
        %v616 = vmul.f32 %v416, 0.70710677
        %v617 = vmul.f32 %v417, 0.70710677
        %v618 = vmul.f32 %v418, 0.70710677
        %v619 = vmul.f32 %v419, 0.70710677
        %v620 = vmul.f32 %v420, 0.70710677
        %v621 = vmul.f32 %v421, 0.70710677
        %v622 = vmul.f32 %v422, 0.70710677
        %v623 = vmul.f32 %v423, 0.70710677
        %v624 = vmul.f32 %v424, 0.70710677
        %v625 = vmul.f32 %v425, 0.70710677
        %v626 = vmul.f32 %v426, 0.70710677
        %v627 = vmul.f32 %v427, 0.70710677
        %v628 = verf.f32.pop %v528
        %v629 = verf.f32.pop %v529
        %v630 = verf.f32.pop %v530
        %v631 = verf.f32.pop %v531
        %v632 = verf.f32.pop %v532
        %v633 = verf.f32.pop %v533
        %v634 = verf.f32.pop %v534
        %v635 = verf.f32.pop %v535
        %v636 = verf.f32.pop %v536
        %v637 = verf.f32.pop %v537
        %v638 = verf.f32.pop %v538
        %v639 = verf.f32.pop %v539
        %v640 = verf.f32.pop %v540
        %v641 = verf.f32.pop %v541
        %v642 = verf.f32.pop %v542
        %v643 = verf.f32.pop %v543
        %v644 = verf.f32.pop %v544
        %v645 = verf.f32.pop %v545
        %v646 = verf.f32.pop %v546
        %v647 = verf.f32.pop %v547
        %v648 = verf.f32.pop %v548
        %v649 = verf.f32.pop %v549
        %v650 = verf.f32.pop %v550
        %v651 = verf.f32.pop %v551
        %v652 = verf.f32.pop %v552
        %v653 = verf.f32.pop %v553
        %v654 = verf.f32.pop %v554
        %v655 = verf.f32.pop %v555
        %v656 = verf.f32.pop %v556
        %v657 = verf.f32.pop %v557
        %v658 = verf.f32.pop %v558
        %v659 = verf.f32.pop %v559
        %v660 = verf.f32.pop %v560
        %v661 = verf.f32.pop %v561
        %v662 = verf.f32.pop %v562
        %v663 = verf.f32.pop %v563
        %v664 = verf.f32.pop %v564
        %v665 = verf.f32.pop %v565
        %v666 = verf.f32.pop %v566
        %v667 = verf.f32.pop %v567
        %v668 = verf.f32.pop %v568
        %v669 = verf.f32.pop %v569
        %v670 = verf.f32.pop %v570
        %v671 = verf.f32.pop %v571
        %v672 = verf.f32.pop %v572
        %v673 = verf.f32.pop %v573
        %v674 = verf.f32.pop %v574
        %v675 = verf.f32.pop %v575
        %v676 = verf.f32.pop %v576
        %v677 = verf.f32.pop %v577
        %v678 = verf.f32.pop %v578
        %v679 = verf.f32.pop %v579
        %v680 = verf.f32.pop %v580
        %v681 = verf.f32.pop %v581
        %v682 = verf.f32.pop %v582
        %v683 = verf.f32.pop %v583
        %v684 = verf.f32.pop %v584
        %v685 = verf.f32.pop %v585
        %v686 = verf.f32.pop %v586
        %v687 = verf.f32.pop %v587
        %v688 = verf.f32.pop %v588
        %v689 = verf.f32.pop %v589
        %v690 = verf.f32.pop %v590
        %v691 = verf.f32.pop %v591
        %v692 = verf.f32.pop %v592
        %v693 = verf.f32.pop %v593
        %v694 = verf.f32.pop %v594
        %v695 = verf.f32.pop %v595
        %v696 = verf.f32.pop %v596
        %v697 = verf.f32.pop %v597
        %v698 = verf.f32.pop %v598
        %v699 = verf.f32.pop %v599
        %v700 = verf.f32.pop %v600
        %v701 = verf.f32.pop %v601
        %v702 = verf.f32.pop %v602
        %v703 = verf.f32.pop %v603
        %v704 = verf.f32.pop %v604
        %v705 = verf.f32.pop %v605
        %v706 = verf.f32.pop %v606
        %v707 = verf.f32.pop %v607
        %v708 = verf.f32.pop %v608
        %v709 = verf.f32.pop %v609
        %v710 = verf.f32.pop %v610
        %v711 = verf.f32.pop %v611
        %v712 = verf.f32.pop %v612
        %v713 = verf.f32.pop %v613
        %v714 = verf.f32.pop %v614
        %v715 = verf.f32.pop %v615
        %v716 = verf.f32.pop %v616
        %v717 = verf.f32.pop %v617
        %v718 = verf.f32.pop %v618
        %v719 = verf.f32.pop %v619
        %v720 = verf.f32.pop %v620
        %v721 = verf.f32.pop %v621
        %v722 = verf.f32.pop %v622
        %v723 = verf.f32.pop %v623
        %v724 = verf.f32.pop %v624
        %v725 = verf.f32.pop %v625
        %v726 = verf.f32.pop %v626
        %v727 = verf.f32.pop %v627
        %v728 = vadd.f32 %v628, 1.0
        %v729 = vadd.f32 %v629, 1.0
        %v730 = vadd.f32 %v630, 1.0
        %v731 = vadd.f32 %v631, 1.0
        %v732 = vadd.f32 %v632, 1.0
        %v733 = vadd.f32 %v633, 1.0
        %v734 = vadd.f32 %v634, 1.0
        %v735 = vadd.f32 %v635, 1.0
        %v736 = vadd.f32 %v636, 1.0
        %v737 = vadd.f32 %v637, 1.0
        %v738 = vadd.f32 %v638, 1.0
        %v739 = vadd.f32 %v639, 1.0
        %v740 = vadd.f32 %v640, 1.0
        %v741 = vadd.f32 %v641, 1.0
        %v742 = vadd.f32 %v642, 1.0
        %v743 = vadd.f32 %v643, 1.0
        %v744 = vadd.f32 %v644, 1.0
        %v745 = vadd.f32 %v645, 1.0
        %v746 = vadd.f32 %v646, 1.0
        %v747 = vadd.f32 %v647, 1.0
        %v748 = vadd.f32 %v648, 1.0
        %v749 = vadd.f32 %v649, 1.0
        %v750 = vadd.f32 %v650, 1.0
        %v751 = vadd.f32 %v651, 1.0
        %v752 = vadd.f32 %v652, 1.0
        %v753 = vadd.f32 %v653, 1.0
        %v754 = vadd.f32 %v654, 1.0
        %v755 = vadd.f32 %v655, 1.0
        %v756 = vadd.f32 %v656, 1.0
        %v757 = vadd.f32 %v657, 1.0
        %v758 = vadd.f32 %v658, 1.0
        %v759 = vadd.f32 %v659, 1.0
        %v760 = vadd.f32 %v660, 1.0
        %v761 = vadd.f32 %v661, 1.0
        %v762 = vadd.f32 %v662, 1.0
        %v763 = vadd.f32 %v663, 1.0
        %v764 = vadd.f32 %v664, 1.0
        %v765 = vadd.f32 %v665, 1.0
        %v766 = vadd.f32 %v666, 1.0
        %v767 = vadd.f32 %v667, 1.0
        %v768 = vadd.f32 %v668, 1.0
        %v769 = vadd.f32 %v669, 1.0
        %v770 = vadd.f32 %v670, 1.0
        %v771 = vadd.f32 %v671, 1.0
        %v772 = vadd.f32 %v672, 1.0
        %v773 = vadd.f32 %v673, 1.0
        %v774 = vadd.f32 %v674, 1.0
        %v775 = vadd.f32 %v675, 1.0
        %v776 = vadd.f32 %v676, 1.0
        %v777 = vadd.f32 %v677, 1.0
        %v778 = vadd.f32 %v678, 1.0
        %v779 = vadd.f32 %v679, 1.0
        %v780 = vadd.f32 %v680, 1.0
        %v781 = vadd.f32 %v681, 1.0
        %v782 = vadd.f32 %v682, 1.0
        %v783 = vadd.f32 %v683, 1.0
        %v784 = vadd.f32 %v684, 1.0
        %v785 = vadd.f32 %v685, 1.0
        %v786 = vadd.f32 %v686, 1.0
        %v787 = vadd.f32 %v687, 1.0
        %v788 = vadd.f32 %v688, 1.0
        %v789 = vadd.f32 %v689, 1.0
        %v790 = vadd.f32 %v690, 1.0
        %v791 = vadd.f32 %v691, 1.0
        %v792 = vadd.f32 %v692, 1.0
        %v793 = vadd.f32 %v693, 1.0
        %v794 = vadd.f32 %v694, 1.0
        %v795 = vadd.f32 %v695, 1.0
        %v796 = vadd.f32 %v696, 1.0
        %v797 = vadd.f32 %v697, 1.0
        %v798 = vadd.f32 %v698, 1.0
        %v799 = vadd.f32 %v699, 1.0
        %v800 = vadd.f32 %v700, 1.0
        %v801 = vadd.f32 %v701, 1.0
        %v802 = vadd.f32 %v702, 1.0
        %v803 = vadd.f32 %v703, 1.0
        %v804 = vadd.f32 %v704, 1.0
        %v805 = vadd.f32 %v705, 1.0
        %v806 = vadd.f32 %v706, 1.0
        %v807 = vadd.f32 %v707, 1.0
        %v808 = vadd.f32 %v708, 1.0
        %v809 = vadd.f32 %v709, 1.0
        %v810 = vadd.f32 %v710, 1.0
        %v811 = vadd.f32 %v711, 1.0
        %v812 = vadd.f32 %v712, 1.0
        %v813 = vadd.f32 %v713, 1.0
        %v814 = vadd.f32 %v714, 1.0
        %v815 = vadd.f32 %v715, 1.0
        %v816 = vadd.f32 %v716, 1.0
        %v817 = vadd.f32 %v717, 1.0
        %v818 = vadd.f32 %v718, 1.0
        %v819 = vadd.f32 %v719, 1.0
        %v820 = vadd.f32 %v720, 1.0
        %v821 = vadd.f32 %v721, 1.0
        %v822 = vadd.f32 %v722, 1.0
        %v823 = vadd.f32 %v723, 1.0
        %v824 = vadd.f32 %v724, 1.0
        %v825 = vadd.f32 %v725, 1.0
        %v826 = vadd.f32 %v726, 1.0
        %v827 = vadd.f32 %v727, 1.0
        %v828 = vmul.f32 %v428, %v728
        %v829 = vmul.f32 %v429, %v729
        %v830 = vmul.f32 %v430, %v730
        %v831 = vmul.f32 %v431, %v731
        %v832 = vmul.f32 %v432, %v732
        %v833 = vmul.f32 %v433, %v733
        %v834 = vmul.f32 %v434, %v734
        %v835 = vmul.f32 %v435, %v735
        %v836 = vmul.f32 %v436, %v736
        %v837 = vmul.f32 %v437, %v737
        %v838 = vmul.f32 %v438, %v738
        %v839 = vmul.f32 %v439, %v739
        %v840 = vmul.f32 %v440, %v740
        %v841 = vmul.f32 %v441, %v741
        %v842 = vmul.f32 %v442, %v742
        %v843 = vmul.f32 %v443, %v743
        %v844 = vmul.f32 %v444, %v744
        %v845 = vmul.f32 %v445, %v745
        %v846 = vmul.f32 %v446, %v746
        %v847 = vmul.f32 %v447, %v747
        %v848 = vmul.f32 %v448, %v748
        %v849 = vmul.f32 %v449, %v749
        %v850 = vmul.f32 %v450, %v750
        %v851 = vmul.f32 %v451, %v751
        %v852 = vmul.f32 %v452, %v752
        %v853 = vmul.f32 %v453, %v753
        %v854 = vmul.f32 %v454, %v754
        %v855 = vmul.f32 %v455, %v755
        %v856 = vmul.f32 %v456, %v756
        %v857 = vmul.f32 %v457, %v757
        %v858 = vmul.f32 %v458, %v758
        %v859 = vmul.f32 %v459, %v759
        %v860 = vmul.f32 %v460, %v760
        %v861 = vmul.f32 %v461, %v761
        %v862 = vmul.f32 %v462, %v762
        %v863 = vmul.f32 %v463, %v763
        %v864 = vmul.f32 %v464, %v764
        %v865 = vmul.f32 %v465, %v765
        %v866 = vmul.f32 %v466, %v766
        %v867 = vmul.f32 %v467, %v767
        %v868 = vmul.f32 %v468, %v768
        %v869 = vmul.f32 %v469, %v769
        %v870 = vmul.f32 %v470, %v770
        %v871 = vmul.f32 %v471, %v771
        %v872 = vmul.f32 %v472, %v772
        %v873 = vmul.f32 %v473, %v773
        %v874 = vmul.f32 %v474, %v774
        %v875 = vmul.f32 %v475, %v775
        %v876 = vmul.f32 %v476, %v776
        %v877 = vmul.f32 %v477, %v777
        %v878 = vmul.f32 %v478, %v778
        %v879 = vmul.f32 %v479, %v779
        %v880 = vmul.f32 %v480, %v780
        %v881 = vmul.f32 %v481, %v781
        %v882 = vmul.f32 %v482, %v782
        %v883 = vmul.f32 %v483, %v783
        %v884 = vmul.f32 %v484, %v784
        %v885 = vmul.f32 %v485, %v785
        %v886 = vmul.f32 %v486, %v786
        %v887 = vmul.f32 %v487, %v787
        %v888 = vmul.f32 %v488, %v788
        %v889 = vmul.f32 %v489, %v789
        %v890 = vmul.f32 %v490, %v790
        %v891 = vmul.f32 %v491, %v791
        %v892 = vmul.f32 %v492, %v792
        %v893 = vmul.f32 %v493, %v793
        %v894 = vmul.f32 %v494, %v794
        %v895 = vmul.f32 %v495, %v795
        %v896 = vmul.f32 %v496, %v796
        %v897 = vmul.f32 %v497, %v797
        %v898 = vmul.f32 %v498, %v798
        %v899 = vmul.f32 %v499, %v799
        %v900 = vmul.f32 %v500, %v800
        %v901 = vmul.f32 %v501, %v801
        %v902 = vmul.f32 %v502, %v802
        %v903 = vmul.f32 %v503, %v803
        %v904 = vmul.f32 %v504, %v804
        %v905 = vmul.f32 %v505, %v805
        %v906 = vmul.f32 %v506, %v806
        %v907 = vmul.f32 %v507, %v807
        %v908 = vmul.f32 %v508, %v808
        %v909 = vmul.f32 %v509, %v809
        %v910 = vmul.f32 %v510, %v810
        %v911 = vmul.f32 %v511, %v811
        %v912 = vmul.f32 %v512, %v812
        %v913 = vmul.f32 %v513, %v813
        %v914 = vmul.f32 %v514, %v814
        %v915 = vmul.f32 %v515, %v815
        %v916 = vmul.f32 %v516, %v816
        %v917 = vmul.f32 %v517, %v817
        %v918 = vmul.f32 %v518, %v818
        %v919 = vmul.f32 %v519, %v819
        %v920 = vmul.f32 %v520, %v820
        %v921 = vmul.f32 %v521, %v821
        %v922 = vmul.f32 %v522, %v822
        %v923 = vmul.f32 %v523, %v823
        %v924 = vmul.f32 %v524, %v824
        %v925 = vmul.f32 %v525, %v825
        %v926 = vmul.f32 %v526, %v826
        %v927 = vmul.f32 %v527, %v827
        %v928 = vld [vmem:[#allocation8] sm:$0xff]
        %v929 = vld [vmem:[#allocation8 + $0x8] sm:$0xff]
        %v930 = vld [vmem:[#allocation8 + $0x10] sm:$0xff]
        %v931 = vld [vmem:[#allocation8 + $0x18] sm:$0xff]
        %v932 = vld [vmem:[#allocation8 + $0x20] sm:$0xff]
        %v933 = vld [vmem:[#allocation8 + $0x28] sm:$0xff]
        %v934 = vld [vmem:[#allocation8 + $0x30] sm:$0xff]
        %v935 = vld [vmem:[#allocation8 + $0x38] sm:$0xff]
        %v936 = vld [vmem:[#allocation8 + $0x40] sm:$0xff]
        %v937 = vld [vmem:[#allocation8 + $0x48] sm:$0xff]
        %v938 = vld [vmem:[#allocation8 + $0x50] sm:$0xff]
        %v939 = vld [vmem:[#allocation8 + $0x58] sm:$0xff]
        %v940 = vld [vmem:[#allocation8 + $0x60] sm:$0xff]
        %v941 = vld [vmem:[#allocation8 + $0x68] sm:$0xff]
        %v942 = vld [vmem:[#allocation8 + $0x70] sm:$0xff]
        %v943 = vld [vmem:[#allocation8 + $0x78] sm:$0xff]
        %v944 = vld [vmem:[#allocation8 + $0x80] sm:$0xff]
        %v945 = vld [vmem:[#allocation8 + $0x88] sm:$0xff]
        %v946 = vld [vmem:[#allocation8 + $0x90] sm:$0xff]
        %v947 = vld [vmem:[#allocation8 + $0x98] sm:$0xff]
        %v948 = vld [vmem:[#allocation8 + $0xa0] sm:$0xff]
        %v949 = vld [vmem:[#allocation8 + $0xa8] sm:$0xff]
        %v950 = vld [vmem:[#allocation8 + $0xb0] sm:$0xff]
        %v951 = vld [vmem:[#allocation8 + $0xb8] sm:$0xff]
        %v952 = vld [vmem:[#allocation8 + $0xc0] sm:$0xff]
        %v953 = vld [vmem:[#allocation8 + $0xc8] sm:$0xff]
        %v954 = vld [vmem:[#allocation8 + $0xd0] sm:$0xff]
        %v955 = vld [vmem:[#allocation8 + $0xd8] sm:$0xff]
        %v956 = vld [vmem:[#allocation8 + $0xe0] sm:$0xff]
        %v957 = vld [vmem:[#allocation8 + $0xe8] sm:$0xff]
        %v958 = vld [vmem:[#allocation8 + $0xf0] sm:$0xff]
        %v959 = vld [vmem:[#allocation8 + $0xf8] sm:$0xff]
        %v960 = vld [vmem:[#allocation8 + $0x100] sm:$0xff]
        %v961 = vld [vmem:[#allocation8 + $0x108] sm:$0xff]
        %v962 = vld [vmem:[#allocation8 + $0x110] sm:$0xff]
        %v963 = vld [vmem:[#allocation8 + $0x118] sm:$0xff]
        %v964 = vld [vmem:[#allocation8 + $0x120] sm:$0xff]
        %v965 = vld [vmem:[#allocation8 + $0x128] sm:$0xff]
        %v966 = vld [vmem:[#allocation8 + $0x130] sm:$0xff]
        %v967 = vld [vmem:[#allocation8 + $0x138] sm:$0xff]
        %v968 = vld [vmem:[#allocation8 + $0x140] sm:$0xff]
        %v969 = vld [vmem:[#allocation8 + $0x148] sm:$0xff]
        %v970 = vld [vmem:[#allocation8 + $0x150] sm:$0xff]
        %v971 = vld [vmem:[#allocation8 + $0x158] sm:$0xff]
        %v972 = vld [vmem:[#allocation8 + $0x160] sm:$0xff]
        %v973 = vld [vmem:[#allocation8 + $0x168] sm:$0xff]
        %v974 = vld [vmem:[#allocation8 + $0x170] sm:$0xff]
        %v975 = vld [vmem:[#allocation8 + $0x178] sm:$0xff]
        %v976 = vld [vmem:[#allocation8 + $0x180] sm:$0xff]
        %v977 = vld [vmem:[#allocation8 + $0x188] sm:$0xff]
        %v978 = vld [vmem:[#allocation8 + $0x190] sm:$0xff]
        %v979 = vld [vmem:[#allocation8 + $0x198] sm:$0xff]
        %v980 = vld [vmem:[#allocation8 + $0x1a0] sm:$0xff]
        %v981 = vld [vmem:[#allocation8 + $0x1a8] sm:$0xff]
        %v982 = vld [vmem:[#allocation8 + $0x1b0] sm:$0xff]
        %v983 = vld [vmem:[#allocation8 + $0x1b8] sm:$0xff]
        %v984 = vld [vmem:[#allocation8 + $0x1c0] sm:$0xff]
        %v985 = vld [vmem:[#allocation8 + $0x1c8] sm:$0xff]
        %v986 = vld [vmem:[#allocation8 + $0x1d0] sm:$0xff]
        %v987 = vld [vmem:[#allocation8 + $0x1d8] sm:$0xff]
        %v988 = vld [vmem:[#allocation8 + $0x1e0] sm:$0xff]
        %v989 = vld [vmem:[#allocation8 + $0x1e8] sm:$0xff]
        %v990 = vld [vmem:[#allocation8 + $0x1f0] sm:$0xff]
        %v991 = vld [vmem:[#allocation8 + $0x1f8] sm:$0xff]
        %v992 = vld [vmem:[#allocation8 + $0x200] sm:$0xff]
        %v993 = vld [vmem:[#allocation8 + $0x208] sm:$0xff]
        %v994 = vld [vmem:[#allocation8 + $0x210] sm:$0xff]
        %v995 = vld [vmem:[#allocation8 + $0x218] sm:$0xff]
        %v996 = vld [vmem:[#allocation8 + $0x220] sm:$0xff]
        %v997 = vld [vmem:[#allocation8 + $0x228] sm:$0xff]
        %v998 = vld [vmem:[#allocation8 + $0x230] sm:$0xff]
        %v999 = vld [vmem:[#allocation8 + $0x238] sm:$0xff]
        %v1000 = vld [vmem:[#allocation8 + $0x240] sm:$0xf]
        %v1001 = vld [vmem:[#allocation8 + $0x248] sm:$0xf]
        %v1002 = vld [vmem:[#allocation8 + $0x250] sm:$0xf]
        %v1003 = vld [vmem:[%s203] sm:$0xff]
        %v1004 = vld [vmem:[%s203 + $0x8] sm:$0xff]
        %v1005 = vld [vmem:[%s203 + $0x10] sm:$0xff]
        %v1006 = vld [vmem:[%s203 + $0x18] sm:$0xff]
        %v1007 = vld [vmem:[%s203 + $0x20] sm:$0xff]
        %v1008 = vld [vmem:[%s203 + $0x28] sm:$0xff]
        %v1009 = vld [vmem:[%s203 + $0x30] sm:$0xff]
        %v1010 = vld [vmem:[%s203 + $0x38] sm:$0xff]
        %v1011 = vld [vmem:[%s203 + $0x40] sm:$0xff]
        %v1012 = vld [vmem:[%s203 + $0x48] sm:$0xff]
        %v1013 = vld [vmem:[%s203 + $0x50] sm:$0xff]
        %v1014 = vld [vmem:[%s203 + $0x58] sm:$0xff]
        %v1015 = vld [vmem:[%s203 + $0x60] sm:$0xff]
        %v1016 = vld [vmem:[%s203 + $0x68] sm:$0xff]
        %v1017 = vld [vmem:[%s203 + $0x70] sm:$0xff]
        %v1018 = vld [vmem:[%s203 + $0x78] sm:$0xff]
        %v1019 = vld [vmem:[%s203 + $0x80] sm:$0xff]
        %v1020 = vld [vmem:[%s203 + $0x88] sm:$0xff]
        %v1021 = vld [vmem:[%s203 + $0x90] sm:$0xff]
        %v1022 = vld [vmem:[%s203 + $0x98] sm:$0xff]
        %v1023 = vld [vmem:[%s203 + $0xa0] sm:$0xff]
        %v1024 = vld [vmem:[%s203 + $0xa8] sm:$0xff]
        %v1025 = vld [vmem:[%s203 + $0xb0] sm:$0xff]
        %v1026 = vld [vmem:[%s203 + $0xb8] sm:$0xff]
        %v1027 = vld [vmem:[%s203 + $0xc0] sm:$0xff]
        %v1028 = vld [vmem:[%s203 + $0xc8] sm:$0xff]
        %v1029 = vld [vmem:[%s203 + $0xd0] sm:$0xff]
        %v1030 = vld [vmem:[%s203 + $0xd8] sm:$0xff]
        %v1031 = vld [vmem:[%s203 + $0xe0] sm:$0xff]
        %v1032 = vld [vmem:[%s203 + $0xe8] sm:$0xff]
        %v1033 = vld [vmem:[%s203 + $0xf0] sm:$0xff]
        %v1034 = vld [vmem:[%s203 + $0xf8] sm:$0xff]
        %v1035 = vld [vmem:[%s203 + $0x100] sm:$0xff]
        %v1036 = vld [vmem:[%s203 + $0x108] sm:$0xff]
        %v1037 = vld [vmem:[%s203 + $0x110] sm:$0xff]
        %v1038 = vld [vmem:[%s203 + $0x118] sm:$0xff]
        %v1039 = vld [vmem:[%s203 + $0x120] sm:$0xff]
        %v1040 = vld [vmem:[%s203 + $0x128] sm:$0xff]
        %v1041 = vld [vmem:[%s203 + $0x130] sm:$0xff]
        %v1042 = vld [vmem:[%s203 + $0x138] sm:$0xff]
        %v1043 = vld [vmem:[%s203 + $0x140] sm:$0xff]
        %v1044 = vld [vmem:[%s203 + $0x148] sm:$0xff]
        %v1045 = vld [vmem:[%s203 + $0x150] sm:$0xff]
        %v1046 = vld [vmem:[%s203 + $0x158] sm:$0xff]
        %v1047 = vld [vmem:[%s203 + $0x160] sm:$0xff]
        %v1048 = vld [vmem:[%s203 + $0x168] sm:$0xff]
        %v1049 = vld [vmem:[%s203 + $0x170] sm:$0xff]
        %v1050 = vld [vmem:[%s203 + $0x178] sm:$0xff]
        %v1051 = vld [vmem:[%s203 + $0x180] sm:$0xff]
        %v1052 = vld [vmem:[%s203 + $0x188] sm:$0xff]
        %v1053 = vld [vmem:[%s203 + $0x190] sm:$0xff]
        %v1054 = vld [vmem:[%s203 + $0x198] sm:$0xff]
        %v1055 = vld [vmem:[%s203 + $0x1a0] sm:$0xff]
        %v1056 = vld [vmem:[%s203 + $0x1a8] sm:$0xff]
        %v1057 = vld [vmem:[%s203 + $0x1b0] sm:$0xff]
        %v1058 = vld [vmem:[%s203 + $0x1b8] sm:$0xff]
        %v1059 = vld [vmem:[%s203 + $0x1c0] sm:$0xff]
        %v1060 = vld [vmem:[%s203 + $0x1c8] sm:$0xff]
        %v1061 = vld [vmem:[%s203 + $0x1d0] sm:$0xff]
        %v1062 = vld [vmem:[%s203 + $0x1d8] sm:$0xff]
        %v1063 = vld [vmem:[%s203 + $0x1e0] sm:$0xff]
        %v1064 = vld [vmem:[%s203 + $0x1e8] sm:$0xff]
        %v1065 = vld [vmem:[%s203 + $0x1f0] sm:$0xff]
        %v1066 = vld [vmem:[%s203 + $0x1f8] sm:$0xff]
        %v1067 = vld [vmem:[%s203 + $0x200] sm:$0xff]
        %v1068 = vld [vmem:[%s203 + $0x208] sm:$0xff]
        %v1069 = vld [vmem:[%s203 + $0x210] sm:$0xff]
        %v1070 = vld [vmem:[%s203 + $0x218] sm:$0xff]
        %v1071 = vld [vmem:[%s203 + $0x220] sm:$0xff]
        %v1072 = vld [vmem:[%s203 + $0x228] sm:$0xff]
        %v1073 = vld [vmem:[%s203 + $0x230] sm:$0xff]
        %v1074 = vld [vmem:[%s203 + $0x238] sm:$0xff]
        %v1075 = vld [vmem:[%s203 + $0x240] sm:$0xff]
        %v1076 = vld [vmem:[%s203 + $0x248] sm:$0xff]
        %v1077 = vld [vmem:[%s203 + $0x250] sm:$0xff]
        %v1078 = vld [vmem:[%s203 + $0x258] sm:$0xff]
        %v1079 = vld [vmem:[%s203 + $0x260] sm:$0xff]
        %v1080 = vld [vmem:[%s203 + $0x268] sm:$0xff]
        %v1081 = vld [vmem:[%s203 + $0x270] sm:$0xff]
        %v1082 = vld [vmem:[%s203 + $0x278] sm:$0xff]
        %v1083 = vld [vmem:[%s203 + $0x280] sm:$0xff]
        %v1084 = vld [vmem:[%s203 + $0x288] sm:$0xff]
        %v1085 = vld [vmem:[%s203 + $0x290] sm:$0xff]
        %v1086 = vld [vmem:[%s203 + $0x298] sm:$0xff]
        %v1087 = vld [vmem:[%s203 + $0x2a0] sm:$0xff]
        %v1088 = vld [vmem:[%s203 + $0x2a8] sm:$0xff]
        %v1089 = vld [vmem:[%s203 + $0x2b0] sm:$0xff]
        %v1090 = vld [vmem:[%s203 + $0x2b8] sm:$0xff]
        %v1091 = vld [vmem:[%s203 + $0x2c0] sm:$0xff]
        %v1092 = vld [vmem:[%s203 + $0x2c8] sm:$0xff]
        %v1093 = vld [vmem:[%s203 + $0x2d0] sm:$0xff]
        %v1094 = vld [vmem:[%s203 + $0x2d8] sm:$0xff]
        %v1095 = vld [vmem:[%s203 + $0x2e0] sm:$0xff]
        %v1096 = vld [vmem:[%s203 + $0x2e8] sm:$0xff]
        %v1097 = vld [vmem:[%s203 + $0x2f0] sm:$0xff]
        %v1098 = vld [vmem:[%s203 + $0x2f8] sm:$0xff]
        %v1099 = vld [vmem:[%s203 + $0x300] sm:$0xff]
        %v1100 = vld [vmem:[%s203 + $0x308] sm:$0xff]
        %v1101 = vld [vmem:[%s203 + $0x310] sm:$0xff]
        %v1102 = vld [vmem:[%s203 + $0x318] sm:$0xff]
        %v1103 = vld [vmem:[%s203 + $0x320] sm:$0xff]
        %v1104 = vld [vmem:[%s203 + $0x328] sm:$0xff]
        %v1105 = vld [vmem:[%s203 + $0x330] sm:$0xff]
        %v1106 = vld [vmem:[%s203 + $0x338] sm:$0xff]
        %v1107 = vld [vmem:[%s203 + $0x340] sm:$0xff]
        %v1108 = vld [vmem:[%s203 + $0x348] sm:$0xff]
        %v1109 = vld [vmem:[%s203 + $0x350] sm:$0xff]
        %v1110 = vld [vmem:[%s203 + $0x358] sm:$0xff]
        %v1111 = vld [vmem:[%s203 + $0x360] sm:$0xff]
        %v1112 = vld [vmem:[%s203 + $0x368] sm:$0xff]
        %v1113 = vld [vmem:[%s203 + $0x370] sm:$0xff]
        %v1114 = vld [vmem:[%s203 + $0x378] sm:$0xff]
        %v1115 = vld [vmem:[%s203 + $0x380] sm:$0xff]
        %v1116 = vld [vmem:[%s203 + $0x388] sm:$0xff]
        %v1117 = vld [vmem:[%s203 + $0x390] sm:$0xff]
        %v1118 = vld [vmem:[%s203 + $0x398] sm:$0xff]
        %v1119 = vld [vmem:[%s203 + $0x3a0] sm:$0xff]
        %v1120 = vld [vmem:[%s203 + $0x3a8] sm:$0xff]
        %v1121 = vld [vmem:[%s203 + $0x3b0] sm:$0xff]
        %v1122 = vld [vmem:[%s203 + $0x3b8] sm:$0xff]
        %v1123 = vld [vmem:[%s203 + $0x3c0] sm:$0xff]
        %v1124 = vld [vmem:[%s203 + $0x3c8] sm:$0xff]
        %v1125 = vld [vmem:[%s203 + $0x3d0] sm:$0xff]
        %v1126 = vld [vmem:[%s203 + $0x3d8] sm:$0xff]
        %v1127 = vld [vmem:[%s203 + $0x3e0] sm:$0xff]
        %v1128 = vld [vmem:[%s203 + $0x3e8] sm:$0xff]
        %v1129 = vld [vmem:[%s203 + $0x3f0] sm:$0xff]
        %v1130 = vld [vmem:[%s203 + $0x3f8] sm:$0xff]
        %v1131 = vld [vmem:[%s203 + $0x400] sm:$0xff]
        %v1132 = vld [vmem:[%s203 + $0x408] sm:$0xff]
        %v1133 = vld [vmem:[%s203 + $0x410] sm:$0xff]
        %v1134 = vld [vmem:[%s203 + $0x418] sm:$0xff]
        %v1135 = vld [vmem:[%s203 + $0x420] sm:$0xff]
        %v1136 = vld [vmem:[%s203 + $0x428] sm:$0xff]
        %v1137 = vld [vmem:[%s203 + $0x430] sm:$0xff]
        %v1138 = vld [vmem:[%s203 + $0x438] sm:$0xff]
        %v1139 = vld [vmem:[%s203 + $0x440] sm:$0xff]
        %v1140 = vld [vmem:[%s203 + $0x448] sm:$0xff]
        %v1141 = vld [vmem:[%s203 + $0x450] sm:$0xff]
        %v1142 = vld [vmem:[%s203 + $0x458] sm:$0xff]
        %v1143 = vld [vmem:[%s203 + $0x460] sm:$0xff]
        %v1144 = vld [vmem:[%s203 + $0x468] sm:$0xff]
        %v1145 = vld [vmem:[%s203 + $0x470] sm:$0xff]
        %v1146 = vld [vmem:[%s203 + $0x478] sm:$0xff]
        %v1147 = vld [vmem:[%s203 + $0x480] sm:$0xff]
        %v1148 = vld [vmem:[%s203 + $0x488] sm:$0xff]
        %v1149 = vld [vmem:[%s203 + $0x490] sm:$0xff]
        %v1150 = vld [vmem:[%s203 + $0x498] sm:$0xff]
        %v1151 = vld [vmem:[%s203 + $0x4a0] sm:$0xff]
        %v1152 = vld [vmem:[%s203 + $0x4a8] sm:$0xff]
        %v1153 = vld [vmem:[%s203 + $0x4b0] sm:$0xff]
        %v1154 = vld [vmem:[%s203 + $0x4b8] sm:$0xff]
        %v1155 = vld [vmem:[%s203 + $0x4c0] sm:$0xff]
        %v1156 = vld [vmem:[%s203 + $0x4c8] sm:$0xff]
        %v1157 = vld [vmem:[%s203 + $0x4d0] sm:$0xff]
        %v1158 = vld [vmem:[%s203 + $0x4d8] sm:$0xff]
        %v1159 = vld [vmem:[%s203 + $0x4e0] sm:$0xff]
        %v1160 = vld [vmem:[%s203 + $0x4e8] sm:$0xff]
        %v1161 = vld [vmem:[%s203 + $0x4f0] sm:$0xff]
        %v1162 = vld [vmem:[%s203 + $0x4f8] sm:$0xff]
        %v1163 = vld [vmem:[%s203 + $0x500] sm:$0xff]
        %v1164 = vld [vmem:[%s203 + $0x508] sm:$0xff]
        %v1165 = vld [vmem:[%s203 + $0x510] sm:$0xff]
        %v1166 = vld [vmem:[%s203 + $0x518] sm:$0xff]
        %v1167 = vld [vmem:[%s203 + $0x520] sm:$0xff]
        %v1168 = vld [vmem:[%s203 + $0x528] sm:$0xff]
        %v1169 = vld [vmem:[%s203 + $0x530] sm:$0xff]
        %v1170 = vld [vmem:[%s203 + $0x538] sm:$0xff]
        %v1171 = vld [vmem:[%s203 + $0x540] sm:$0xff]
        %v1172 = vld [vmem:[%s203 + $0x548] sm:$0xff]
        %v1173 = vld [vmem:[%s203 + $0x550] sm:$0xff]
        %v1174 = vld [vmem:[%s203 + $0x558] sm:$0xff]
        %v1175 = vld [vmem:[%s203 + $0x560] sm:$0xff]
        %v1176 = vld [vmem:[%s203 + $0x568] sm:$0xff]
        %v1177 = vld [vmem:[%s203 + $0x570] sm:$0xff]
        %v1178 = vld [vmem:[%s203 + $0x578] sm:$0xff]
        %v1179 = vld [vmem:[%s203 + $0x580] sm:$0xff]
        %v1180 = vld [vmem:[%s203 + $0x588] sm:$0xff]
        %v1181 = vld [vmem:[%s203 + $0x590] sm:$0xff]
        %v1182 = vld [vmem:[%s203 + $0x598] sm:$0xff]
        %v1183 = vld [vmem:[%s203 + $0x5a0] sm:$0xff]
        %v1184 = vld [vmem:[%s203 + $0x5a8] sm:$0xff]
        %v1185 = vld [vmem:[%s203 + $0x5b0] sm:$0xff]
        %v1186 = vld [vmem:[%s203 + $0x5b8] sm:$0xff]
        %v1187 = vld [vmem:[%s203 + $0x5c0] sm:$0xff]
        %v1188 = vld [vmem:[%s203 + $0x5c8] sm:$0xff]
        %v1189 = vld [vmem:[%s203 + $0x5d0] sm:$0xff]
        %v1190 = vld [vmem:[%s203 + $0x5d8] sm:$0xff]
        %v1191 = vld [vmem:[%s203 + $0x5e0] sm:$0xff]
        %v1192 = vld [vmem:[%s203 + $0x5e8] sm:$0xff]
        %v1193 = vld [vmem:[%s203 + $0x5f0] sm:$0xff]
        %v1194 = vld [vmem:[%s203 + $0x5f8] sm:$0xff]
        %1195 = vmatprep.subr.mxu0 %v1004
        %1196 = vmatpush1.msra.mxu0 %v1003
        %1197 = vmatprep.subr.mxu0 %v1007
        %1198 = vmatpush1.msra.mxu0 %v1006
        %1199 = vmatprep.subr.mxu0 %v1010
        %1200 = vmatpush1.msra.mxu0 %v1009
        %1201 = vmatprep.subr.mxu0 %v1013
        %1202 = vmatpush1.msra.mxu0 %v1012
        %1203 = vmatprep.subr.mxu0 %v1016
        %1204 = vmatpush1.msra.mxu0 %v1015
        %1205 = vmatprep.subr.mxu0 %v1019
        %1206 = vmatpush1.msra.mxu0 %v1018
        %1207 = vmatprep.subr.mxu0 %v1022
        %1208 = vmatpush1.msra.mxu0 %v1021
        %1209 = vmatprep.subr.mxu0 %v1025
        %1210 = vmatpush1.msra.mxu0 %v1024
        %1211 = vmatprep.subr.mxu0 %v1028
        %1212 = vmatpush1.msra.mxu0 %v1027
        %1213 = vmatprep.subr.mxu0 %v1031
        %1214 = vmatpush1.msra.mxu0 %v1030
        %1215 = vmatprep.subr.mxu0 %v1034
        %1216 = vmatpush1.msra.mxu0 %v1033
        %1217 = vmatprep.subr.mxu0 %v1037
        %1218 = vmatpush1.msra.mxu0 %v1036
        %1219 = vmatprep.subr.mxu0 %v1040
        %1220 = vmatpush1.msra.mxu0 %v1039
        %1221 = vmatprep.subr.mxu0 %v1043
        %1222 = vmatpush1.msra.mxu0 %v1042
        %1223 = vmatprep.subr.mxu0 %v1046
        %1224 = vmatpush1.msra.mxu0 %v1045
        %1225 = vmatprep.subr.mxu0 %v1049
        %1226 = vmatpush1.msra.mxu0 %v1048
        %1227 = vmatprep.subr.mxu0 %v1052
        %1228 = vmatpush1.msra.mxu0 %v1051
        %1229 = vmatprep.subr.mxu0 %v1055
        %1230 = vmatpush1.msra.mxu0 %v1054
        %1231 = vmatprep.subr.mxu0 %v1058
        %1232 = vmatpush1.msra.mxu0 %v1057
        %1233 = vmatprep.subr.mxu0 %v1061
        %1234 = vmatpush1.msra.mxu0 %v1060
        %1235 = vmatprep.subr.mxu0 %v1064
        %1236 = vmatpush1.msra.mxu0 %v1063
        %1237 = vmatprep.subr.mxu0 %v1067
        %1238 = vmatpush1.msra.mxu0 %v1066
        %1239 = vmatprep.subr.mxu0 %v1070
        %1240 = vmatpush1.msra.mxu0 %v1069
        %1241 = vmatprep.subr.mxu0 %v1073
        %1242 = vmatpush1.msra.mxu0 %v1072
        %1243 = vmatprep.subr.mxu0 %v1076
        %1244 = vmatpush1.msra.mxu0 %v1075
        %1245 = vmatprep.subr.mxu0 %v1079
        %1246 = vmatpush1.msra.mxu0 %v1078
        %1247 = vmatprep.subr.mxu0 %v1082
        %1248 = vmatpush1.msra.mxu0 %v1081
        %1249 = vmatprep.subr.mxu0 %v1085
        %1250 = vmatpush1.msra.mxu0 %v1084
        %1251 = vmatprep.subr.mxu0 %v1088
        %1252 = vmatpush1.msra.mxu0 %v1087
        %1253 = vmatprep.subr.mxu0 %v1091
        %1254 = vmatpush1.msra.mxu0 %v1090
        %1255 = vmatprep.subr.mxu0 %v1094
        %1256 = vmatpush1.msra.mxu0 %v1093
        %1257 = vmatprep.subr.mxu0 %v1097
        %1258 = vmatpush1.msra.mxu0 %v1096
        %1259 = vmatprep.mubr.f32.mxu0 %v829
        %1260 = vmatmul.mubr.f32.gmra.mrb[0].mxu0 %v828
        %v1261 = vpop.f32.mrb[0].mxu0
        %v1262 = vadd.f32 0.0, %v1261
        %v1263 = vpop.f32.mrb[0].mxu0
        %v1264 = vadd.f32 0.0, %v1263
        %1265 = vmatprep.mubr.f32.mxu0 %v833
        %1266 = vmatmul.mubr.f32.gmra.mrb[0].mxu0 %v832
        %v1267 = vpop.f32.mrb[0].mxu0
        %v1268 = vadd.f32 0.0, %v1267
        %v1269 = vpop.f32.mrb[0].mxu0
        %v1270 = vadd.f32 0.0, %v1269
        %1271 = vmatprep.mubr.f32.mxu0 %v837
        %1272 = vmatmul.mubr.f32.gmra.mrb[0].mxu0 %v836
        %v1273 = vpop.f32.mrb[0].mxu0
        %v1274 = vadd.f32 0.0, %v1273
        %v1275 = vpop.f32.mrb[0].mxu0
        %v1276 = vadd.f32 0.0, %v1275
        %1277 = vmatprep.mubr.f32.mxu0 %v841
        %1278 = vmatmul.mubr.f32.gmra.mrb[0].mxu0 %v840
        %v1279 = vpop.f32.mrb[0].mxu0
        %v1280 = vadd.f32 0.0, %v1279
        %v1281 = vpop.f32.mrb[0].mxu0
        %v1282 = vadd.f32 0.0, %v1281
        %1283 = vmatprep.mubr.f32.mxu0 %v845
        %1284 = vmatmul.mubr.f32.gmra.mrb[0].mxu0 %v844
        %v1285 = vpop.f32.mrb[0].mxu0
        %v1286 = vadd.f32 0.0, %v1285
        %v1287 = vpop.f32.mrb[0].mxu0
        %v1288 = vadd.f32 0.0, %v1287
        %1289 = vmatprep.mubr.f32.mxu0 %v849
        %1290 = vmatmul.mubr.f32.gmra.mrb[0].mxu0 %v848
        %v1291 = vpop.f32.mrb[0].mxu0
        %v1292 = vadd.f32 0.0, %v1291
        %v1293 = vpop.f32.mrb[0].mxu0
        %v1294 = vadd.f32 0.0, %v1293
        %1295 = vmatprep.mubr.f32.mxu0 %v853
        %1296 = vmatmul.mubr.f32.gmra.mrb[0].mxu0 %v852
        %v1297 = vpop.f32.mrb[0].mxu0
        %v1298 = vadd.f32 0.0, %v1297
        %v1299 = vpop.f32.mrb[0].mxu0
        %v1300 = vadd.f32 0.0, %v1299
        %1301 = vmatprep.mubr.f32.mxu0 %v857
        %1302 = vmatmul.mubr.f32.gmra.mrb[0].mxu0 %v856
        %v1303 = vpop.f32.mrb[0].mxu0
        %v1304 = vadd.f32 0.0, %v1303
        %v1305 = vpop.f32.mrb[0].mxu0
        %v1306 = vadd.f32 0.0, %v1305
        %1307 = vmatprep.mubr.f32.mxu0 %v861
        %1308 = vmatmul.mubr.f32.gmra.mrb[0].mxu0 %v860
        %v1309 = vpop.f32.mrb[0].mxu0
        %v1310 = vadd.f32 0.0, %v1309
        %v1311 = vpop.f32.mrb[0].mxu0
        %v1312 = vadd.f32 0.0, %v1311
        %1313 = vmatprep.mubr.f32.mxu0 %v865
        %1314 = vmatmul.mubr.f32.gmra.mrb[0].mxu0 %v864
        %v1315 = vpop.f32.mrb[0].mxu0
        %v1316 = vadd.f32 0.0, %v1315
        %v1317 = vpop.f32.mrb[0].mxu0
        %v1318 = vadd.f32 0.0, %v1317
        %1319 = vmatprep.mubr.f32.mxu0 %v869
        %1320 = vmatmul.mubr.f32.gmra.mrb[0].mxu0 %v868
        %v1321 = vpop.f32.mrb[0].mxu0
        %v1322 = vadd.f32 0.0, %v1321
        %v1323 = vpop.f32.mrb[0].mxu0
        %v1324 = vadd.f32 0.0, %v1323
        %1325 = vmatprep.mubr.f32.mxu0 %v873
        %1326 = vmatmul.mubr.f32.gmra.mrb[0].mxu0 %v872
        %v1327 = vpop.f32.mrb[0].mxu0
        %v1328 = vadd.f32 0.0, %v1327
        %v1329 = vpop.f32.mrb[0].mxu0
        %v1330 = vadd.f32 0.0, %v1329
        %1331 = vmatprep.mubr.f32.mxu0 %v877
        %1332 = vmatmul.mubr.f32.gmra.mrb[0].mxu0 %v876
        %v1333 = vpop.f32.mrb[0].mxu0
        %v1334 = vadd.f32 0.0, %v1333
        %v1335 = vpop.f32.mrb[0].mxu0
        %v1336 = vadd.f32 0.0, %v1335
        %1337 = vmatprep.mubr.f32.mxu0 %v881
        %1338 = vmatmul.mubr.f32.gmra.mrb[0].mxu0 %v880
        %v1339 = vpop.f32.mrb[0].mxu0
        %v1340 = vadd.f32 0.0, %v1339
        %v1341 = vpop.f32.mrb[0].mxu0
        %v1342 = vadd.f32 0.0, %v1341
        %1343 = vmatprep.mubr.f32.mxu0 %v885
        %1344 = vmatmul.mubr.f32.gmra.mrb[0].mxu0 %v884
        %v1345 = vpop.f32.mrb[0].mxu0
        %v1346 = vadd.f32 0.0, %v1345
        %v1347 = vpop.f32.mrb[0].mxu0
        %v1348 = vadd.f32 0.0, %v1347
        %1349 = vmatprep.mubr.f32.mxu0 %v889
        %1350 = vmatmul.mubr.f32.gmra.mrb[0].mxu0 %v888
        %v1351 = vpop.f32.mrb[0].mxu0
        %v1352 = vadd.f32 0.0, %v1351
        %v1353 = vpop.f32.mrb[0].mxu0
        %v1354 = vadd.f32 0.0, %v1353
        %1355 = vmatprep.mubr.f32.mxu0 %v893
        %1356 = vmatmul.mubr.f32.gmra.mrb[0].mxu0 %v892
        %v1357 = vpop.f32.mrb[0].mxu0
        %v1358 = vadd.f32 0.0, %v1357
        %v1359 = vpop.f32.mrb[0].mxu0
        %v1360 = vadd.f32 0.0, %v1359
        %1361 = vmatprep.mubr.f32.mxu0 %v897
        %1362 = vmatmul.mubr.f32.gmra.mrb[0].mxu0 %v896
        %v1363 = vpop.f32.mrb[0].mxu0
        %v1364 = vadd.f32 0.0, %v1363
        %v1365 = vpop.f32.mrb[0].mxu0
        %v1366 = vadd.f32 0.0, %v1365
        %1367 = vmatprep.mubr.f32.mxu0 %v901
        %1368 = vmatmul.mubr.f32.gmra.mrb[0].mxu0 %v900
        %v1369 = vpop.f32.mrb[0].mxu0
        %v1370 = vadd.f32 0.0, %v1369
        %v1371 = vpop.f32.mrb[0].mxu0
        %v1372 = vadd.f32 0.0, %v1371
        %1373 = vmatprep.mubr.f32.mxu0 %v905
        %1374 = vmatmul.mubr.f32.gmra.mrb[0].mxu0 %v904
        %v1375 = vpop.f32.mrb[0].mxu0
        %v1376 = vadd.f32 0.0, %v1375
        %v1377 = vpop.f32.mrb[0].mxu0
        %v1378 = vadd.f32 0.0, %v1377
        %1379 = vmatprep.mubr.f32.mxu0 %v909
        %1380 = vmatmul.mubr.f32.gmra.mrb[0].mxu0 %v908
        %v1381 = vpop.f32.mrb[0].mxu0
        %v1382 = vadd.f32 0.0, %v1381
        %v1383 = vpop.f32.mrb[0].mxu0
        %v1384 = vadd.f32 0.0, %v1383
        %1385 = vmatprep.mubr.f32.mxu0 %v913
        %1386 = vmatmul.mubr.f32.gmra.mrb[0].mxu0 %v912
        %v1387 = vpop.f32.mrb[0].mxu0
        %v1388 = vadd.f32 0.0, %v1387
        %v1389 = vpop.f32.mrb[0].mxu0
        %v1390 = vadd.f32 0.0, %v1389
        %1391 = vmatprep.mubr.f32.mxu0 %v917
        %1392 = vmatmul.mubr.f32.gmra.mrb[0].mxu0 %v916
        %v1393 = vpop.f32.mrb[0].mxu0
        %v1394 = vadd.f32 0.0, %v1393
        %v1395 = vpop.f32.mrb[0].mxu0
        %v1396 = vadd.f32 0.0, %v1395
        %1397 = vmatprep.mubr.f32.mxu0 %v921
        %1398 = vmatmul.mubr.f32.gmra.mrb[0].mxu0 %v920
        %v1399 = vpop.f32.mrb[0].mxu0
        %v1400 = vadd.f32 0.0, %v1399
        %v1401 = vpop.f32.mrb[0].mxu0
        %v1402 = vadd.f32 0.0, %v1401
        %1403 = vmatprep.mubr.f32.mxu0 %v925
        %1404 = vmatmul.mubr.f32.gmra.mrb[0].mxu0 %v924
        %v1405 = vpop.f32.mrb[0].mxu0
        %v1406 = vadd.f32 0.0, %v1405
        %v1407 = vpop.f32.mrb[0].mxu0
        %v1408 = vadd.f32 0.0, %v1407
        %1409 = vdwg.mxu0
        %1410 = vmatprep.subr.mxu0 %v1100
        %1411 = vmatpush1.msra.mxu0 %v1099
        %1412 = vmatprep.subr.mxu0 %v1103
        %1413 = vmatpush1.msra.mxu0 %v1102
        %1414 = vmatprep.subr.mxu0 %v1106
        %1415 = vmatpush1.msra.mxu0 %v1105
        %1416 = vmatprep.subr.mxu0 %v1109
        %1417 = vmatpush1.msra.mxu0 %v1108
        %1418 = vmatprep.subr.mxu0 %v1112
        %1419 = vmatpush1.msra.mxu0 %v1111
        %1420 = vmatprep.subr.mxu0 %v1115
        %1421 = vmatpush1.msra.mxu0 %v1114
        %1422 = vmatprep.subr.mxu0 %v1118
        %1423 = vmatpush1.msra.mxu0 %v1117
        %1424 = vmatprep.subr.mxu0 %v1121
        %1425 = vmatpush1.msra.mxu0 %v1120
        %1426 = vmatprep.subr.mxu0 %v1124
        %1427 = vmatpush1.msra.mxu0 %v1123
        %1428 = vmatprep.subr.mxu0 %v1127
        %1429 = vmatpush1.msra.mxu0 %v1126
        %1430 = vmatprep.subr.mxu0 %v1130
        %1431 = vmatpush1.msra.mxu0 %v1129
        %1432 = vmatprep.subr.mxu0 %v1133
        %1433 = vmatpush1.msra.mxu0 %v1132
        %1434 = vmatprep.subr.mxu0 %v1136
        %1435 = vmatpush1.msra.mxu0 %v1135
        %1436 = vmatprep.subr.mxu0 %v1139
        %1437 = vmatpush1.msra.mxu0 %v1138
        %1438 = vmatprep.subr.mxu0 %v1142
        %1439 = vmatpush1.msra.mxu0 %v1141
        %1440 = vmatprep.subr.mxu0 %v1145
        %1441 = vmatpush1.msra.mxu0 %v1144
        %1442 = vmatprep.subr.mxu0 %v1148
        %1443 = vmatpush1.msra.mxu0 %v1147
        %1444 = vmatprep.subr.mxu0 %v1151
        %1445 = vmatpush1.msra.mxu0 %v1150
        %1446 = vmatprep.subr.mxu0 %v1154
        %1447 = vmatpush1.msra.mxu0 %v1153
        %1448 = vmatprep.subr.mxu0 %v1157
        %1449 = vmatpush1.msra.mxu0 %v1156
        %1450 = vmatprep.subr.mxu0 %v1160
        %1451 = vmatpush1.msra.mxu0 %v1159
        %1452 = vmatprep.subr.mxu0 %v1163
        %1453 = vmatpush1.msra.mxu0 %v1162
        %1454 = vmatprep.subr.mxu0 %v1166
        %1455 = vmatpush1.msra.mxu0 %v1165
        %1456 = vmatprep.subr.mxu0 %v1169
        %1457 = vmatpush1.msra.mxu0 %v1168
        %1458 = vmatprep.subr.mxu0 %v1172
        %1459 = vmatpush1.msra.mxu0 %v1171
        %1460 = vmatprep.subr.mxu0 %v1175
        %1461 = vmatpush1.msra.mxu0 %v1174
        %1462 = vmatprep.subr.mxu0 %v1178
        %1463 = vmatpush1.msra.mxu0 %v1177
        %1464 = vmatprep.subr.mxu0 %v1181
        %1465 = vmatpush1.msra.mxu0 %v1180
        %1466 = vmatprep.subr.mxu0 %v1184
        %1467 = vmatpush1.msra.mxu0 %v1183
        %1468 = vmatprep.subr.mxu0 %v1187
        %1469 = vmatpush1.msra.mxu0 %v1186
        %1470 = vmatprep.subr.mxu0 %v1190
        %1471 = vmatpush1.msra.mxu0 %v1189
        %1472 = vmatprep.subr.mxu0 %v1193
        %1473 = vmatpush1.msra.mxu0 %v1192
        %1474 = vmatprep.mubr.f32.mxu0 %v831
        %1475 = vmatmul.mubr.f32.gmra.mrb[0].mxu0 %v830
        %v1476 = vpop.f32.mrb[0].mxu0
        %v1477 = vadd.f32 %v1262, %v1476
        %v1478 = vpop.f32.mrb[0].mxu0
        %v1479 = vadd.f32 %v1264, %v1478
        %1480 = vmatprep.mubr.f32.mxu0 %v835
        %1481 = vmatmul.mubr.f32.gmra.mrb[0].mxu0 %v834
        %v1482 = vpop.f32.mrb[0].mxu0
        %v1483 = vadd.f32 %v1268, %v1482
        %v1484 = vpop.f32.mrb[0].mxu0
        %v1485 = vadd.f32 %v1270, %v1484
        %1486 = vmatprep.mubr.f32.mxu0 %v839
        %1487 = vmatmul.mubr.f32.gmra.mrb[0].mxu0 %v838
        %v1488 = vpop.f32.mrb[0].mxu0
        %v1489 = vadd.f32 %v1274, %v1488
        %v1490 = vpop.f32.mrb[0].mxu0
        %v1491 = vadd.f32 %v1276, %v1490
        %1492 = vmatprep.mubr.f32.mxu0 %v843
        %1493 = vmatmul.mubr.f32.gmra.mrb[0].mxu0 %v842
        %v1494 = vpop.f32.mrb[0].mxu0
        %v1495 = vadd.f32 %v1280, %v1494
        %v1496 = vpop.f32.mrb[0].mxu0
        %v1497 = vadd.f32 %v1282, %v1496
        %1498 = vmatprep.mubr.f32.mxu0 %v847
        %1499 = vmatmul.mubr.f32.gmra.mrb[0].mxu0 %v846
        %v1500 = vpop.f32.mrb[0].mxu0
        %v1501 = vadd.f32 %v1286, %v1500
        %v1502 = vpop.f32.mrb[0].mxu0
        %v1503 = vadd.f32 %v1288, %v1502
        %1504 = vmatprep.mubr.f32.mxu0 %v851
        %1505 = vmatmul.mubr.f32.gmra.mrb[0].mxu0 %v850
        %v1506 = vpop.f32.mrb[0].mxu0
        %v1507 = vadd.f32 %v1292, %v1506
        %v1508 = vpop.f32.mrb[0].mxu0
        %v1509 = vadd.f32 %v1294, %v1508
        %1510 = vmatprep.mubr.f32.mxu0 %v855
        %1511 = vmatmul.mubr.f32.gmra.mrb[0].mxu0 %v854
        %v1512 = vpop.f32.mrb[0].mxu0
        %v1513 = vadd.f32 %v1298, %v1512
        %v1514 = vpop.f32.mrb[0].mxu0
        %v1515 = vadd.f32 %v1300, %v1514
        %1516 = vmatprep.mubr.f32.mxu0 %v859
        %1517 = vmatmul.mubr.f32.gmra.mrb[0].mxu0 %v858
        %v1518 = vpop.f32.mrb[0].mxu0
        %v1519 = vadd.f32 %v1304, %v1518
        %v1520 = vpop.f32.mrb[0].mxu0
        %v1521 = vadd.f32 %v1306, %v1520
        %1522 = vmatprep.mubr.f32.mxu0 %v863
        %1523 = vmatmul.mubr.f32.gmra.mrb[0].mxu0 %v862
        %v1524 = vpop.f32.mrb[0].mxu0
        %v1525 = vadd.f32 %v1310, %v1524
        %v1526 = vpop.f32.mrb[0].mxu0
        %v1527 = vadd.f32 %v1312, %v1526
        %1528 = vmatprep.mubr.f32.mxu0 %v867
        %1529 = vmatmul.mubr.f32.gmra.mrb[0].mxu0 %v866
        %v1530 = vpop.f32.mrb[0].mxu0
        %v1531 = vadd.f32 %v1316, %v1530
        %v1532 = vpop.f32.mrb[0].mxu0
        %v1533 = vadd.f32 %v1318, %v1532
        %1534 = vmatprep.mubr.f32.mxu0 %v871
        %1535 = vmatmul.mubr.f32.gmra.mrb[0].mxu0 %v870
        %v1536 = vpop.f32.mrb[0].mxu0
        %v1537 = vadd.f32 %v1322, %v1536
        %v1538 = vpop.f32.mrb[0].mxu0
        %v1539 = vadd.f32 %v1324, %v1538
        %1540 = vmatprep.mubr.f32.mxu0 %v875
        %1541 = vmatmul.mubr.f32.gmra.mrb[0].mxu0 %v874
        %v1542 = vpop.f32.mrb[0].mxu0
        %v1543 = vadd.f32 %v1328, %v1542
        %v1544 = vpop.f32.mrb[0].mxu0
        %v1545 = vadd.f32 %v1330, %v1544
        %1546 = vmatprep.mubr.f32.mxu0 %v879
        %1547 = vmatmul.mubr.f32.gmra.mrb[0].mxu0 %v878
        %v1548 = vpop.f32.mrb[0].mxu0
        %v1549 = vadd.f32 %v1334, %v1548
        %v1550 = vpop.f32.mrb[0].mxu0
        %v1551 = vadd.f32 %v1336, %v1550
        %1552 = vmatprep.mubr.f32.mxu0 %v883
        %1553 = vmatmul.mubr.f32.gmra.mrb[0].mxu0 %v882
        %v1554 = vpop.f32.mrb[0].mxu0
        %v1555 = vadd.f32 %v1340, %v1554
        %v1556 = vpop.f32.mrb[0].mxu0
        %v1557 = vadd.f32 %v1342, %v1556
        %1558 = vmatprep.mubr.f32.mxu0 %v887
        %1559 = vmatmul.mubr.f32.gmra.mrb[0].mxu0 %v886
        %v1560 = vpop.f32.mrb[0].mxu0
        %v1561 = vadd.f32 %v1346, %v1560
        %v1562 = vpop.f32.mrb[0].mxu0
        %v1563 = vadd.f32 %v1348, %v1562
        %1564 = vmatprep.mubr.f32.mxu0 %v891
        %1565 = vmatmul.mubr.f32.gmra.mrb[0].mxu0 %v890
        %v1566 = vpop.f32.mrb[0].mxu0
        %v1567 = vadd.f32 %v1352, %v1566
        %v1568 = vpop.f32.mrb[0].mxu0
        %v1569 = vadd.f32 %v1354, %v1568
        %1570 = vmatprep.mubr.f32.mxu0 %v895
        %1571 = vmatmul.mubr.f32.gmra.mrb[0].mxu0 %v894
        %v1572 = vpop.f32.mrb[0].mxu0
        %v1573 = vadd.f32 %v1358, %v1572
        %v1574 = vpop.f32.mrb[0].mxu0
        %v1575 = vadd.f32 %v1360, %v1574
        %1576 = vmatprep.mubr.f32.mxu0 %v899
        %1577 = vmatmul.mubr.f32.gmra.mrb[0].mxu0 %v898
        %v1578 = vpop.f32.mrb[0].mxu0
        %v1579 = vadd.f32 %v1364, %v1578
        %v1580 = vpop.f32.mrb[0].mxu0
        %v1581 = vadd.f32 %v1366, %v1580
        %1582 = vmatprep.mubr.f32.mxu0 %v903
        %1583 = vmatmul.mubr.f32.gmra.mrb[0].mxu0 %v902
        %v1584 = vpop.f32.mrb[0].mxu0
        %v1585 = vadd.f32 %v1370, %v1584
        %v1586 = vpop.f32.mrb[0].mxu0
        %v1587 = vadd.f32 %v1372, %v1586
        %1588 = vmatprep.mubr.f32.mxu0 %v907
        %1589 = vmatmul.mubr.f32.gmra.mrb[0].mxu0 %v906
        %v1590 = vpop.f32.mrb[0].mxu0
        %v1591 = vadd.f32 %v1376, %v1590
        %v1592 = vpop.f32.mrb[0].mxu0
        %v1593 = vadd.f32 %v1378, %v1592
        %1594 = vmatprep.mubr.f32.mxu0 %v911
        %1595 = vmatmul.mubr.f32.gmra.mrb[0].mxu0 %v910
        %v1596 = vpop.f32.mrb[0].mxu0
        %v1597 = vadd.f32 %v1382, %v1596
        %v1598 = vpop.f32.mrb[0].mxu0
        %v1599 = vadd.f32 %v1384, %v1598
        %1600 = vmatprep.mubr.f32.mxu0 %v915
        %1601 = vmatmul.mubr.f32.gmra.mrb[0].mxu0 %v914
        %v1602 = vpop.f32.mrb[0].mxu0
        %v1603 = vadd.f32 %v1388, %v1602
        %v1604 = vpop.f32.mrb[0].mxu0
        %v1605 = vadd.f32 %v1390, %v1604
        %1606 = vmatprep.mubr.f32.mxu0 %v919
        %1607 = vmatmul.mubr.f32.gmra.mrb[0].mxu0 %v918
        %v1608 = vpop.f32.mrb[0].mxu0
        %v1609 = vadd.f32 %v1394, %v1608
        %v1610 = vpop.f32.mrb[0].mxu0
        %v1611 = vadd.f32 %v1396, %v1610
        %1612 = vmatprep.mubr.f32.mxu0 %v923
        %1613 = vmatmul.mubr.f32.gmra.mrb[0].mxu0 %v922
        %v1614 = vpop.f32.mrb[0].mxu0
        %v1615 = vadd.f32 %v1400, %v1614
        %v1616 = vpop.f32.mrb[0].mxu0
        %v1617 = vadd.f32 %v1402, %v1616
        %1618 = vmatprep.mubr.f32.mxu0 %v927
        %1619 = vmatmul.mubr.f32.gmra.mrb[0].mxu0 %v926
        %v1620 = vpop.f32.mrb[0].mxu0
        %v1621 = vadd.f32 %v1406, %v1620
        %v1622 = vpop.f32.mrb[0].mxu0
        %v1623 = vadd.f32 %v1408, %v1622
        %1624 = vdwg.mxu0
        %1625 = vmatprep.subr.mxu0 0.0
        %1626 = vmatpush1.msra.mxu0 %v1005
        %1627 = vmatprep.subr.mxu0 0.0
        %1628 = vmatpush1.msra.mxu0 %v1008
        %1629 = vmatprep.subr.mxu0 0.0
        %1630 = vmatpush1.msra.mxu0 %v1011
        %1631 = vmatprep.subr.mxu0 0.0
        %1632 = vmatpush1.msra.mxu0 %v1014
        %1633 = vmatprep.subr.mxu0 0.0
        %1634 = vmatpush1.msra.mxu0 %v1017
        %1635 = vmatprep.subr.mxu0 0.0
        %1636 = vmatpush1.msra.mxu0 %v1020
        %1637 = vmatprep.subr.mxu0 0.0
        %1638 = vmatpush1.msra.mxu0 %v1023
        %1639 = vmatprep.subr.mxu0 0.0
        %1640 = vmatpush1.msra.mxu0 %v1026
        %1641 = vmatprep.subr.mxu0 0.0
        %1642 = vmatpush1.msra.mxu0 %v1029
        %1643 = vmatprep.subr.mxu0 0.0
        %1644 = vmatpush1.msra.mxu0 %v1032
        %1645 = vmatprep.subr.mxu0 0.0
        %1646 = vmatpush1.msra.mxu0 %v1035
        %1647 = vmatprep.subr.mxu0 0.0
        %1648 = vmatpush1.msra.mxu0 %v1038
        %1649 = vmatprep.subr.mxu0 0.0
        %1650 = vmatpush1.msra.mxu0 %v1041
        %1651 = vmatprep.subr.mxu0 0.0
        %1652 = vmatpush1.msra.mxu0 %v1044
        %1653 = vmatprep.subr.mxu0 0.0
        %1654 = vmatpush1.msra.mxu0 %v1047
        %1655 = vmatprep.subr.mxu0 0.0
        %1656 = vmatpush1.msra.mxu0 %v1050
        %1657 = vmatprep.subr.mxu0 0.0
        %1658 = vmatpush1.msra.mxu0 %v1053
        %1659 = vmatprep.subr.mxu0 0.0
        %1660 = vmatpush1.msra.mxu0 %v1056
        %1661 = vmatprep.subr.mxu0 0.0
        %1662 = vmatpush1.msra.mxu0 %v1059
        %1663 = vmatprep.subr.mxu0 0.0
        %1664 = vmatpush1.msra.mxu0 %v1062
        %1665 = vmatprep.subr.mxu0 0.0
        %1666 = vmatpush1.msra.mxu0 %v1065
        %1667 = vmatprep.subr.mxu0 0.0
        %1668 = vmatpush1.msra.mxu0 %v1068
        %1669 = vmatprep.subr.mxu0 0.0
        %1670 = vmatpush1.msra.mxu0 %v1071
        %1671 = vmatprep.subr.mxu0 0.0
        %1672 = vmatpush1.msra.mxu0 %v1074
        %1673 = vmatprep.subr.mxu0 0.0
        %1674 = vmatpush1.msra.mxu0 %v1077
        %1675 = vmatprep.subr.mxu0 0.0
        %1676 = vmatpush1.msra.mxu0 %v1080
        %1677 = vmatprep.subr.mxu0 0.0
        %1678 = vmatpush1.msra.mxu0 %v1083
        %1679 = vmatprep.subr.mxu0 0.0
        %1680 = vmatpush1.msra.mxu0 %v1086
        %1681 = vmatprep.subr.mxu0 0.0
        %1682 = vmatpush1.msra.mxu0 %v1089
        %1683 = vmatprep.subr.mxu0 0.0
        %1684 = vmatpush1.msra.mxu0 %v1092
        %1685 = vmatprep.subr.mxu0 0.0
        %1686 = vmatpush1.msra.mxu0 %v1095
        %1687 = vmatprep.subr.mxu0 0.0
        %1688 = vmatpush1.msra.mxu0 %v1098
        %1689 = vmatprep.mubr.f32.mxu0 %v829
        %1690 = vmatmul.mubr.f32.gmra.mrb[0].mxu0 %v828
        %v1691 = vpop.f32.mrb[0].mxu0
        %v1692 = vadd.f32 0.0, %v1691
        %v1693 = vpop.f32.mrb[0].mxu0
        %1694 = vmatprep.mubr.f32.mxu0 %v833
        %1695 = vmatmul.mubr.f32.gmra.mrb[0].mxu0 %v832
        %v1696 = vpop.f32.mrb[0].mxu0
        %v1697 = vadd.f32 0.0, %v1696
        %v1698 = vpop.f32.mrb[0].mxu0
        %1699 = vmatprep.mubr.f32.mxu0 %v837
        %1700 = vmatmul.mubr.f32.gmra.mrb[0].mxu0 %v836
        %v1701 = vpop.f32.mrb[0].mxu0
        %v1702 = vadd.f32 0.0, %v1701
        %v1703 = vpop.f32.mrb[0].mxu0
        %1704 = vmatprep.mubr.f32.mxu0 %v841
        %1705 = vmatmul.mubr.f32.gmra.mrb[0].mxu0 %v840
        %v1706 = vpop.f32.mrb[0].mxu0
        %v1707 = vadd.f32 0.0, %v1706
        %v1708 = vpop.f32.mrb[0].mxu0
        %1709 = vmatprep.mubr.f32.mxu0 %v845
        %1710 = vmatmul.mubr.f32.gmra.mrb[0].mxu0 %v844
        %v1711 = vpop.f32.mrb[0].mxu0
        %v1712 = vadd.f32 0.0, %v1711
        %v1713 = vpop.f32.mrb[0].mxu0
        %1714 = vmatprep.mubr.f32.mxu0 %v849
        %1715 = vmatmul.mubr.f32.gmra.mrb[0].mxu0 %v848
        %v1716 = vpop.f32.mrb[0].mxu0
        %v1717 = vadd.f32 0.0, %v1716
        %v1718 = vpop.f32.mrb[0].mxu0
        %1719 = vmatprep.mubr.f32.mxu0 %v853
        %1720 = vmatmul.mubr.f32.gmra.mrb[0].mxu0 %v852
        %v1721 = vpop.f32.mrb[0].mxu0
        %v1722 = vadd.f32 0.0, %v1721
        %v1723 = vpop.f32.mrb[0].mxu0
        %1724 = vmatprep.mubr.f32.mxu0 %v857
        %1725 = vmatmul.mubr.f32.gmra.mrb[0].mxu0 %v856
        %v1726 = vpop.f32.mrb[0].mxu0
        %v1727 = vadd.f32 0.0, %v1726
        %v1728 = vpop.f32.mrb[0].mxu0
        %1729 = vmatprep.mubr.f32.mxu0 %v861
        %1730 = vmatmul.mubr.f32.gmra.mrb[0].mxu0 %v860
        %v1731 = vpop.f32.mrb[0].mxu0
        %v1732 = vadd.f32 0.0, %v1731
        %v1733 = vpop.f32.mrb[0].mxu0
        %1734 = vmatprep.mubr.f32.mxu0 %v865
        %1735 = vmatmul.mubr.f32.gmra.mrb[0].mxu0 %v864
        %v1736 = vpop.f32.mrb[0].mxu0
        %v1737 = vadd.f32 0.0, %v1736
        %v1738 = vpop.f32.mrb[0].mxu0
        %1739 = vmatprep.mubr.f32.mxu0 %v869
        %1740 = vmatmul.mubr.f32.gmra.mrb[0].mxu0 %v868
        %v1741 = vpop.f32.mrb[0].mxu0
        %v1742 = vadd.f32 0.0, %v1741
        %v1743 = vpop.f32.mrb[0].mxu0
        %1744 = vmatprep.mubr.f32.mxu0 %v873
        %1745 = vmatmul.mubr.f32.gmra.mrb[0].mxu0 %v872
        %v1746 = vpop.f32.mrb[0].mxu0
        %v1747 = vadd.f32 0.0, %v1746
        %v1748 = vpop.f32.mrb[0].mxu0
        %1749 = vmatprep.mubr.f32.mxu0 %v877
        %1750 = vmatmul.mubr.f32.gmra.mrb[0].mxu0 %v876
        %v1751 = vpop.f32.mrb[0].mxu0
        %v1752 = vadd.f32 0.0, %v1751
        %v1753 = vpop.f32.mrb[0].mxu0
        %1754 = vmatprep.mubr.f32.mxu0 %v881
        %1755 = vmatmul.mubr.f32.gmra.mrb[0].mxu0 %v880
        %v1756 = vpop.f32.mrb[0].mxu0
        %v1757 = vadd.f32 0.0, %v1756
        %v1758 = vpop.f32.mrb[0].mxu0
        %1759 = vmatprep.mubr.f32.mxu0 %v885
        %1760 = vmatmul.mubr.f32.gmra.mrb[0].mxu0 %v884
        %v1761 = vpop.f32.mrb[0].mxu0
        %v1762 = vadd.f32 0.0, %v1761
        %v1763 = vpop.f32.mrb[0].mxu0
        %1764 = vmatprep.mubr.f32.mxu0 %v889
        %1765 = vmatmul.mubr.f32.gmra.mrb[0].mxu0 %v888
        %v1766 = vpop.f32.mrb[0].mxu0
        %v1767 = vadd.f32 0.0, %v1766
        %v1768 = vpop.f32.mrb[0].mxu0
        %1769 = vmatprep.mubr.f32.mxu0 %v893
        %1770 = vmatmul.mubr.f32.gmra.mrb[0].mxu0 %v892
        %v1771 = vpop.f32.mrb[0].mxu0
        %v1772 = vadd.f32 0.0, %v1771
        %v1773 = vpop.f32.mrb[0].mxu0
        %1774 = vmatprep.mubr.f32.mxu0 %v897
        %1775 = vmatmul.mubr.f32.gmra.mrb[0].mxu0 %v896
        %v1776 = vpop.f32.mrb[0].mxu0
        %v1777 = vadd.f32 0.0, %v1776
        %v1778 = vpop.f32.mrb[0].mxu0
        %1779 = vmatprep.mubr.f32.mxu0 %v901
        %1780 = vmatmul.mubr.f32.gmra.mrb[0].mxu0 %v900
        %v1781 = vpop.f32.mrb[0].mxu0
        %v1782 = vadd.f32 0.0, %v1781
        %v1783 = vpop.f32.mrb[0].mxu0
        %1784 = vmatprep.mubr.f32.mxu0 %v905
        %1785 = vmatmul.mubr.f32.gmra.mrb[0].mxu0 %v904
        %v1786 = vpop.f32.mrb[0].mxu0
        %v1787 = vadd.f32 0.0, %v1786
        %v1788 = vpop.f32.mrb[0].mxu0
        %1789 = vmatprep.mubr.f32.mxu0 %v909
        %1790 = vmatmul.mubr.f32.gmra.mrb[0].mxu0 %v908
        %v1791 = vpop.f32.mrb[0].mxu0
        %v1792 = vadd.f32 0.0, %v1791
        %v1793 = vpop.f32.mrb[0].mxu0
        %1794 = vmatprep.mubr.f32.mxu0 %v913
        %1795 = vmatmul.mubr.f32.gmra.mrb[0].mxu0 %v912
        %v1796 = vpop.f32.mrb[0].mxu0
        %v1797 = vadd.f32 0.0, %v1796
        %v1798 = vpop.f32.mrb[0].mxu0
        %1799 = vmatprep.mubr.f32.mxu0 %v917
        %1800 = vmatmul.mubr.f32.gmra.mrb[0].mxu0 %v916
        %v1801 = vpop.f32.mrb[0].mxu0
        %v1802 = vadd.f32 0.0, %v1801
        %v1803 = vpop.f32.mrb[0].mxu0
        %1804 = vmatprep.mubr.f32.mxu0 %v921
        %1805 = vmatmul.mubr.f32.gmra.mrb[0].mxu0 %v920
        %v1806 = vpop.f32.mrb[0].mxu0
        %v1807 = vadd.f32 0.0, %v1806
        %v1808 = vpop.f32.mrb[0].mxu0
        %1809 = vmatprep.mubr.f32.mxu0 %v925
        %1810 = vmatmul.mubr.f32.gmra.mrb[0].mxu0 %v924
        %v1811 = vpop.f32.mrb[0].mxu0
        %v1812 = vadd.f32 0.0, %v1811
        %v1813 = vpop.f32.mrb[0].mxu0
        %1814 = vdwg.mxu0
        %1815 = vmatprep.subr.mxu0 0.0
        %1816 = vmatpush1.msra.mxu0 %v1101
        %1817 = vmatprep.subr.mxu0 0.0
        %1818 = vmatpush1.msra.mxu0 %v1104
        %1819 = vmatprep.subr.mxu0 0.0
        %1820 = vmatpush1.msra.mxu0 %v1107
        %1821 = vmatprep.subr.mxu0 0.0
        %1822 = vmatpush1.msra.mxu0 %v1110
        %1823 = vmatprep.subr.mxu0 0.0
        %1824 = vmatpush1.msra.mxu0 %v1113
        %1825 = vmatprep.subr.mxu0 0.0
        %1826 = vmatpush1.msra.mxu0 %v1116
        %1827 = vmatprep.subr.mxu0 0.0
        %1828 = vmatpush1.msra.mxu0 %v1119
        %1829 = vmatprep.subr.mxu0 0.0
        %1830 = vmatpush1.msra.mxu0 %v1122
        %1831 = vmatprep.subr.mxu0 0.0
        %1832 = vmatpush1.msra.mxu0 %v1125
        %1833 = vmatprep.subr.mxu0 0.0
        %1834 = vmatpush1.msra.mxu0 %v1128
        %1835 = vmatprep.subr.mxu0 0.0
        %1836 = vmatpush1.msra.mxu0 %v1131
        %1837 = vmatprep.subr.mxu0 0.0
        %1838 = vmatpush1.msra.mxu0 %v1134
        %1839 = vmatprep.subr.mxu0 0.0
        %1840 = vmatpush1.msra.mxu0 %v1137
        %1841 = vmatprep.subr.mxu0 0.0
        %1842 = vmatpush1.msra.mxu0 %v1140
        %1843 = vmatprep.subr.mxu0 0.0
        %1844 = vmatpush1.msra.mxu0 %v1143
        %1845 = vmatprep.subr.mxu0 0.0
        %1846 = vmatpush1.msra.mxu0 %v1146
        %1847 = vmatprep.subr.mxu0 0.0
        %1848 = vmatpush1.msra.mxu0 %v1149
        %1849 = vmatprep.subr.mxu0 0.0
        %1850 = vmatpush1.msra.mxu0 %v1152
        %1851 = vmatprep.subr.mxu0 0.0
        %1852 = vmatpush1.msra.mxu0 %v1155
        %1853 = vmatprep.subr.mxu0 0.0
        %1854 = vmatpush1.msra.mxu0 %v1158
        %1855 = vmatprep.subr.mxu0 0.0
        %1856 = vmatpush1.msra.mxu0 %v1161
        %1857 = vmatprep.subr.mxu0 0.0
        %1858 = vmatpush1.msra.mxu0 %v1164
        %1859 = vmatprep.subr.mxu0 0.0
        %1860 = vmatpush1.msra.mxu0 %v1167
        %1861 = vmatprep.subr.mxu0 0.0
        %1862 = vmatpush1.msra.mxu0 %v1170
        %1863 = vmatprep.subr.mxu0 0.0
        %1864 = vmatpush1.msra.mxu0 %v1173
        %1865 = vmatprep.subr.mxu0 0.0
        %1866 = vmatpush1.msra.mxu0 %v1176
        %1867 = vmatprep.subr.mxu0 0.0
        %1868 = vmatpush1.msra.mxu0 %v1179
        %1869 = vmatprep.subr.mxu0 0.0
        %1870 = vmatpush1.msra.mxu0 %v1182
        %1871 = vmatprep.subr.mxu0 0.0
        %1872 = vmatpush1.msra.mxu0 %v1185
        %1873 = vmatprep.subr.mxu0 0.0
        %1874 = vmatpush1.msra.mxu0 %v1188
        %1875 = vmatprep.subr.mxu0 0.0
        %1876 = vmatpush1.msra.mxu0 %v1191
        %1877 = vmatprep.subr.mxu0 0.0
        %1878 = vmatpush1.msra.mxu0 %v1194
        %1879 = vmatprep.mubr.f32.mxu0 %v831
        %1880 = vmatmul.mubr.f32.gmra.mrb[0].mxu0 %v830
        %v1881 = vpop.f32.mrb[0].mxu0
        %v1882 = vadd.f32 %v1692, %v1881
        %v1883 = vpop.f32.mrb[0].mxu0
        %1884 = vmatprep.mubr.f32.mxu0 %v835
        %1885 = vmatmul.mubr.f32.gmra.mrb[0].mxu0 %v834
        %v1886 = vpop.f32.mrb[0].mxu0
        %v1887 = vadd.f32 %v1697, %v1886
        %v1888 = vpop.f32.mrb[0].mxu0
        %1889 = vmatprep.mubr.f32.mxu0 %v839
        %1890 = vmatmul.mubr.f32.gmra.mrb[0].mxu0 %v838
        %v1891 = vpop.f32.mrb[0].mxu0
        %v1892 = vadd.f32 %v1702, %v1891
        %v1893 = vpop.f32.mrb[0].mxu0
        %1894 = vmatprep.mubr.f32.mxu0 %v843
        %1895 = vmatmul.mubr.f32.gmra.mrb[0].mxu0 %v842
        %v1896 = vpop.f32.mrb[0].mxu0
        %v1897 = vadd.f32 %v1707, %v1896
        %v1898 = vpop.f32.mrb[0].mxu0
        %1899 = vmatprep.mubr.f32.mxu0 %v847
        %1900 = vmatmul.mubr.f32.gmra.mrb[0].mxu0 %v846
        %v1901 = vpop.f32.mrb[0].mxu0
        %v1902 = vadd.f32 %v1712, %v1901
        %v1903 = vpop.f32.mrb[0].mxu0
        %1904 = vmatprep.mubr.f32.mxu0 %v851
        %1905 = vmatmul.mubr.f32.gmra.mrb[0].mxu0 %v850
        %v1906 = vpop.f32.mrb[0].mxu0
        %v1907 = vadd.f32 %v1717, %v1906
        %v1908 = vpop.f32.mrb[0].mxu0
        %1909 = vmatprep.mubr.f32.mxu0 %v855
        %1910 = vmatmul.mubr.f32.gmra.mrb[0].mxu0 %v854
        %v1911 = vpop.f32.mrb[0].mxu0
        %v1912 = vadd.f32 %v1722, %v1911
        %v1913 = vpop.f32.mrb[0].mxu0
        %1914 = vmatprep.mubr.f32.mxu0 %v859
        %1915 = vmatmul.mubr.f32.gmra.mrb[0].mxu0 %v858
        %v1916 = vpop.f32.mrb[0].mxu0
        %v1917 = vadd.f32 %v1727, %v1916
        %v1918 = vpop.f32.mrb[0].mxu0
        %1919 = vmatprep.mubr.f32.mxu0 %v863
        %1920 = vmatmul.mubr.f32.gmra.mrb[0].mxu0 %v862
        %v1921 = vpop.f32.mrb[0].mxu0
        %v1922 = vadd.f32 %v1732, %v1921
        %v1923 = vpop.f32.mrb[0].mxu0
        %1924 = vmatprep.mubr.f32.mxu0 %v867
        %1925 = vmatmul.mubr.f32.gmra.mrb[0].mxu0 %v866
        %v1926 = vpop.f32.mrb[0].mxu0
        %v1927 = vadd.f32 %v1737, %v1926
        %v1928 = vpop.f32.mrb[0].mxu0
        %1929 = vmatprep.mubr.f32.mxu0 %v871
        %1930 = vmatmul.mubr.f32.gmra.mrb[0].mxu0 %v870
        %v1931 = vpop.f32.mrb[0].mxu0
        %v1932 = vadd.f32 %v1742, %v1931
        %v1933 = vpop.f32.mrb[0].mxu0
        %1934 = vmatprep.mubr.f32.mxu0 %v875
        %1935 = vmatmul.mubr.f32.gmra.mrb[0].mxu0 %v874
        %v1936 = vpop.f32.mrb[0].mxu0
        %v1937 = vadd.f32 %v1747, %v1936
        %v1938 = vpop.f32.mrb[0].mxu0
        %1939 = vmatprep.mubr.f32.mxu0 %v879
        %1940 = vmatmul.mubr.f32.gmra.mrb[0].mxu0 %v878
        %v1941 = vpop.f32.mrb[0].mxu0
        %v1942 = vadd.f32 %v1752, %v1941
        %v1943 = vpop.f32.mrb[0].mxu0
        %1944 = vmatprep.mubr.f32.mxu0 %v883
        %1945 = vmatmul.mubr.f32.gmra.mrb[0].mxu0 %v882
        %v1946 = vpop.f32.mrb[0].mxu0
        %v1947 = vadd.f32 %v1757, %v1946
        %v1948 = vpop.f32.mrb[0].mxu0
        %1949 = vmatprep.mubr.f32.mxu0 %v887
        %1950 = vmatmul.mubr.f32.gmra.mrb[0].mxu0 %v886
        %v1951 = vpop.f32.mrb[0].mxu0
        %v1952 = vadd.f32 %v1762, %v1951
        %v1953 = vpop.f32.mrb[0].mxu0
        %1954 = vmatprep.mubr.f32.mxu0 %v891
        %1955 = vmatmul.mubr.f32.gmra.mrb[0].mxu0 %v890
        %v1956 = vpop.f32.mrb[0].mxu0
        %v1957 = vadd.f32 %v1767, %v1956
        %v1958 = vpop.f32.mrb[0].mxu0
        %1959 = vmatprep.mubr.f32.mxu0 %v895
        %1960 = vmatmul.mubr.f32.gmra.mrb[0].mxu0 %v894
        %v1961 = vpop.f32.mrb[0].mxu0
        %v1962 = vadd.f32 %v1772, %v1961
        %v1963 = vpop.f32.mrb[0].mxu0
        %1964 = vmatprep.mubr.f32.mxu0 %v899
        %1965 = vmatmul.mubr.f32.gmra.mrb[0].mxu0 %v898
        %v1966 = vpop.f32.mrb[0].mxu0
        %v1967 = vadd.f32 %v1777, %v1966
        %v1968 = vpop.f32.mrb[0].mxu0
        %1969 = vmatprep.mubr.f32.mxu0 %v903
        %1970 = vmatmul.mubr.f32.gmra.mrb[0].mxu0 %v902
        %v1971 = vpop.f32.mrb[0].mxu0
        %v1972 = vadd.f32 %v1782, %v1971
        %v1973 = vpop.f32.mrb[0].mxu0
        %1974 = vmatprep.mubr.f32.mxu0 %v907
        %1975 = vmatmul.mubr.f32.gmra.mrb[0].mxu0 %v906
        %v1976 = vpop.f32.mrb[0].mxu0
        %v1977 = vadd.f32 %v1787, %v1976
        %v1978 = vpop.f32.mrb[0].mxu0
        %1979 = vmatprep.mubr.f32.mxu0 %v911
        %1980 = vmatmul.mubr.f32.gmra.mrb[0].mxu0 %v910
        %v1981 = vpop.f32.mrb[0].mxu0
        %v1982 = vadd.f32 %v1792, %v1981
        %v1983 = vpop.f32.mrb[0].mxu0
        %1984 = vmatprep.mubr.f32.mxu0 %v915
        %1985 = vmatmul.mubr.f32.gmra.mrb[0].mxu0 %v914
        %v1986 = vpop.f32.mrb[0].mxu0
        %v1987 = vadd.f32 %v1797, %v1986
        %v1988 = vpop.f32.mrb[0].mxu0
        %1989 = vmatprep.mubr.f32.mxu0 %v919
        %1990 = vmatmul.mubr.f32.gmra.mrb[0].mxu0 %v918
        %v1991 = vpop.f32.mrb[0].mxu0
        %v1992 = vadd.f32 %v1802, %v1991
        %v1993 = vpop.f32.mrb[0].mxu0
        %1994 = vmatprep.mubr.f32.mxu0 %v923
        %1995 = vmatmul.mubr.f32.gmra.mrb[0].mxu0 %v922
        %v1996 = vpop.f32.mrb[0].mxu0
        %v1997 = vadd.f32 %v1807, %v1996
        %v1998 = vpop.f32.mrb[0].mxu0
        %1999 = vmatprep.mubr.f32.mxu0 %v927
        %2000 = vmatmul.mubr.f32.gmra.mrb[0].mxu0 %v926
        %v2001 = vpop.f32.mrb[0].mxu0
        %v2002 = vadd.f32 %v1812, %v2001
        %v2003 = vpop.f32.mrb[0].mxu0
        %2004 = vdwg.mxu0
        %v2005 = vadd.f32 %v928, %v1477
        %v2006 = vadd.f32 %v929, %v1479
        %v2007 = vadd.f32 %v930, %v1882
        %v2008 = vadd.f32 %v931, %v1483
        %v2009 = vadd.f32 %v932, %v1485
        %v2010 = vadd.f32 %v933, %v1887
        %v2011 = vadd.f32 %v934, %v1489
        %v2012 = vadd.f32 %v935, %v1491
        %v2013 = vadd.f32 %v936, %v1892
        %v2014 = vadd.f32 %v937, %v1495
        %v2015 = vadd.f32 %v938, %v1497
        %v2016 = vadd.f32 %v939, %v1897
        %v2017 = vadd.f32 %v940, %v1501
        %v2018 = vadd.f32 %v941, %v1503
        %v2019 = vadd.f32 %v942, %v1902
        %v2020 = vadd.f32 %v943, %v1507
        %v2021 = vadd.f32 %v944, %v1509
        %v2022 = vadd.f32 %v945, %v1907
        %v2023 = vadd.f32 %v946, %v1513
        %v2024 = vadd.f32 %v947, %v1515
        %v2025 = vadd.f32 %v948, %v1912
        %v2026 = vadd.f32 %v949, %v1519
        %v2027 = vadd.f32 %v950, %v1521
        %v2028 = vadd.f32 %v951, %v1917
        %v2029 = vadd.f32 %v952, %v1525
        %v2030 = vadd.f32 %v953, %v1527
        %v2031 = vadd.f32 %v954, %v1922
        %v2032 = vadd.f32 %v955, %v1531
        %v2033 = vadd.f32 %v956, %v1533
        %v2034 = vadd.f32 %v957, %v1927
        %v2035 = vadd.f32 %v958, %v1537
        %v2036 = vadd.f32 %v959, %v1539
        %v2037 = vadd.f32 %v960, %v1932
        %v2038 = vadd.f32 %v961, %v1543
        %v2039 = vadd.f32 %v962, %v1545
        %v2040 = vadd.f32 %v963, %v1937
        %v2041 = vadd.f32 %v964, %v1549
        %v2042 = vadd.f32 %v965, %v1551
        %v2043 = vadd.f32 %v966, %v1942
        %v2044 = vadd.f32 %v967, %v1555
        %v2045 = vadd.f32 %v968, %v1557
        %v2046 = vadd.f32 %v969, %v1947
        %v2047 = vadd.f32 %v970, %v1561
        %v2048 = vadd.f32 %v971, %v1563
        %v2049 = vadd.f32 %v972, %v1952
        %v2050 = vadd.f32 %v973, %v1567
        %v2051 = vadd.f32 %v974, %v1569
        %v2052 = vadd.f32 %v975, %v1957
        %v2053 = vadd.f32 %v976, %v1573
        %v2054 = vadd.f32 %v977, %v1575
        %v2055 = vadd.f32 %v978, %v1962
        %v2056 = vadd.f32 %v979, %v1579
        %v2057 = vadd.f32 %v980, %v1581
        %v2058 = vadd.f32 %v981, %v1967
        %v2059 = vadd.f32 %v982, %v1585
        %v2060 = vadd.f32 %v983, %v1587
        %v2061 = vadd.f32 %v984, %v1972
        %v2062 = vadd.f32 %v985, %v1591
        %v2063 = vadd.f32 %v986, %v1593
        %v2064 = vadd.f32 %v987, %v1977
        %v2065 = vadd.f32 %v988, %v1597
        %v2066 = vadd.f32 %v989, %v1599
        %v2067 = vadd.f32 %v990, %v1982
        %v2068 = vadd.f32 %v991, %v1603
        %v2069 = vadd.f32 %v992, %v1605
        %v2070 = vadd.f32 %v993, %v1987
        %v2071 = vadd.f32 %v994, %v1609
        %v2072 = vadd.f32 %v995, %v1611
        %v2073 = vadd.f32 %v996, %v1992
        %v2074 = vadd.f32 %v997, %v1615
        %v2075 = vadd.f32 %v998, %v1617
        %v2076 = vadd.f32 %v999, %v1997
        %v2077 = vadd.f32 %v1000, %v1621
        %v2078 = vadd.f32 %v1001, %v1623
        %v2079 = vadd.f32 %v1002, %v2002
        %2080 = vst [vmem:[#allocation8] sm:$0xff] %v2005
        %2081 = vst [vmem:[#allocation8 + $0x8] sm:$0xff] %v2006
        %2082 = vst [vmem:[#allocation8 + $0x10] sm:$0xff] %v2007
        %2083 = vst [vmem:[#allocation8 + $0x18] sm:$0xff] %v2008
        %2084 = vst [vmem:[#allocation8 + $0x20] sm:$0xff] %v2009
        %2085 = vst [vmem:[#allocation8 + $0x28] sm:$0xff] %v2010
        %2086 = vst [vmem:[#allocation8 + $0x30] sm:$0xff] %v2011
        %2087 = vst [vmem:[#allocation8 + $0x38] sm:$0xff] %v2012
        %2088 = vst [vmem:[#allocation8 + $0x40] sm:$0xff] %v2013
        %2089 = vst [vmem:[#allocation8 + $0x48] sm:$0xff] %v2014
        %2090 = vst [vmem:[#allocation8 + $0x50] sm:$0xff] %v2015
        %2091 = vst [vmem:[#allocation8 + $0x58] sm:$0xff] %v2016
        %2092 = vst [vmem:[#allocation8 + $0x60] sm:$0xff] %v2017
        %2093 = vst [vmem:[#allocation8 + $0x68] sm:$0xff] %v2018
        %2094 = vst [vmem:[#allocation8 + $0x70] sm:$0xff] %v2019
        %2095 = vst [vmem:[#allocation8 + $0x78] sm:$0xff] %v2020
        %2096 = vst [vmem:[#allocation8 + $0x80] sm:$0xff] %v2021
        %2097 = vst [vmem:[#allocation8 + $0x88] sm:$0xff] %v2022
        %2098 = vst [vmem:[#allocation8 + $0x90] sm:$0xff] %v2023
        %2099 = vst [vmem:[#allocation8 + $0x98] sm:$0xff] %v2024
        %2100 = vst [vmem:[#allocation8 + $0xa0] sm:$0xff] %v2025
        %2101 = vst [vmem:[#allocation8 + $0xa8] sm:$0xff] %v2026
        %2102 = vst [vmem:[#allocation8 + $0xb0] sm:$0xff] %v2027
        %2103 = vst [vmem:[#allocation8 + $0xb8] sm:$0xff] %v2028
        %2104 = vst [vmem:[#allocation8 + $0xc0] sm:$0xff] %v2029
        %2105 = vst [vmem:[#allocation8 + $0xc8] sm:$0xff] %v2030
        %2106 = vst [vmem:[#allocation8 + $0xd0] sm:$0xff] %v2031
        %2107 = vst [vmem:[#allocation8 + $0xd8] sm:$0xff] %v2032
        %2108 = vst [vmem:[#allocation8 + $0xe0] sm:$0xff] %v2033
        %2109 = vst [vmem:[#allocation8 + $0xe8] sm:$0xff] %v2034
        %2110 = vst [vmem:[#allocation8 + $0xf0] sm:$0xff] %v2035
        %2111 = vst [vmem:[#allocation8 + $0xf8] sm:$0xff] %v2036
        %2112 = vst [vmem:[#allocation8 + $0x100] sm:$0xff] %v2037
        %2113 = vst [vmem:[#allocation8 + $0x108] sm:$0xff] %v2038
        %2114 = vst [vmem:[#allocation8 + $0x110] sm:$0xff] %v2039
        %2115 = vst [vmem:[#allocation8 + $0x118] sm:$0xff] %v2040
        %2116 = vst [vmem:[#allocation8 + $0x120] sm:$0xff] %v2041
        %2117 = vst [vmem:[#allocation8 + $0x128] sm:$0xff] %v2042
        %2118 = vst [vmem:[#allocation8 + $0x130] sm:$0xff] %v2043
        %2119 = vst [vmem:[#allocation8 + $0x138] sm:$0xff] %v2044
        %2120 = vst [vmem:[#allocation8 + $0x140] sm:$0xff] %v2045
        %2121 = vst [vmem:[#allocation8 + $0x148] sm:$0xff] %v2046
        %2122 = vst [vmem:[#allocation8 + $0x150] sm:$0xff] %v2047
        %2123 = vst [vmem:[#allocation8 + $0x158] sm:$0xff] %v2048
        %2124 = vst [vmem:[#allocation8 + $0x160] sm:$0xff] %v2049
        %2125 = vst [vmem:[#allocation8 + $0x168] sm:$0xff] %v2050
        %2126 = vst [vmem:[#allocation8 + $0x170] sm:$0xff] %v2051
        %2127 = vst [vmem:[#allocation8 + $0x178] sm:$0xff] %v2052
        %2128 = vst [vmem:[#allocation8 + $0x180] sm:$0xff] %v2053
        %2129 = vst [vmem:[#allocation8 + $0x188] sm:$0xff] %v2054
        %2130 = vst [vmem:[#allocation8 + $0x190] sm:$0xff] %v2055
        %2131 = vst [vmem:[#allocation8 + $0x198] sm:$0xff] %v2056
        %2132 = vst [vmem:[#allocation8 + $0x1a0] sm:$0xff] %v2057
        %2133 = vst [vmem:[#allocation8 + $0x1a8] sm:$0xff] %v2058
        %2134 = vst [vmem:[#allocation8 + $0x1b0] sm:$0xff] %v2059
        %2135 = vst [vmem:[#allocation8 + $0x1b8] sm:$0xff] %v2060
        %2136 = vst [vmem:[#allocation8 + $0x1c0] sm:$0xff] %v2061
        %2137 = vst [vmem:[#allocation8 + $0x1c8] sm:$0xff] %v2062
        %2138 = vst [vmem:[#allocation8 + $0x1d0] sm:$0xff] %v2063
        %2139 = vst [vmem:[#allocation8 + $0x1d8] sm:$0xff] %v2064
        %2140 = vst [vmem:[#allocation8 + $0x1e0] sm:$0xff] %v2065
        %2141 = vst [vmem:[#allocation8 + $0x1e8] sm:$0xff] %v2066
        %2142 = vst [vmem:[#allocation8 + $0x1f0] sm:$0xff] %v2067
        %2143 = vst [vmem:[#allocation8 + $0x1f8] sm:$0xff] %v2068
        %2144 = vst [vmem:[#allocation8 + $0x200] sm:$0xff] %v2069
        %2145 = vst [vmem:[#allocation8 + $0x208] sm:$0xff] %v2070
        %2146 = vst [vmem:[#allocation8 + $0x210] sm:$0xff] %v2071
        %2147 = vst [vmem:[#allocation8 + $0x218] sm:$0xff] %v2072
        %2148 = vst [vmem:[#allocation8 + $0x220] sm:$0xff] %v2073
        %2149 = vst [vmem:[#allocation8 + $0x228] sm:$0xff] %v2074
        %2150 = vst [vmem:[#allocation8 + $0x230] sm:$0xff] %v2075
        %2151 = vst [vmem:[#allocation8 + $0x238] sm:$0xff] %v2076
        %2152 = vst [vmem:[#allocation8 + $0x240] sm:$0xf] %v2077
        %2153 = vst [vmem:[#allocation8 + $0x248] sm:$0xf] %v2078
        %2154 = vst [vmem:[#allocation8 + $0x250] sm:$0xf] %v2079
        // Predicated region
        $region49: #{tpu_custom_call.1} parent=31 // pred_check
          %p2155 = pneg %p107
        $region50: #{tpu_custom_call.1} parent=31 // pred_check_branch
          %2157 = sbr.rel (%p2155) target = $region52
        $region51: #{tpu_custom_call.1} parent=31 // pred_region
          %s2159 = ssub.s32 9600, 9600
          %2160 = vsyncadd [#allocation4], %s2159
          %s2161 = sshll.u32 [#allocation8], 4
          %s2162 = int_to_ptr.vmem [resolvable:$true] %s2161
          %2167 = dma.vmem_to_hbm [thread:$0]  %s2162, 9600, %s3, [#allocation4], 384, 384, 24
        $region52: #{tpu_custom_call.1} parent=31 // pred_fallthru
          _
        // Predicated region
        $region53: #{tpu_custom_call.1} parent=31 // pred_check
          %p2168 = pneg %p107
        $region54: #{tpu_custom_call.1} parent=31 // pred_check_branch
          %2170 = sbr.rel (%p2168) target = $region56
        $region55: #{tpu_custom_call.1} parent=31 // pred_region
          %2171 = dma.done [#allocation4], 9600
        $region56: #{tpu_custom_call.1} parent=31 // pred_fallthru
          _
      $region32: #{tpu_custom_call.1} parent=5 // pred_fallthru
        _
      %p2172 = scmp.le.s32.totalorder 2, %s16
      // Predicated region
      $region57: #{tpu_custom_call.1} parent=5 // pred_check
        %p2173 = pneg %p2172
      $region58: #{tpu_custom_call.1} parent=5 // pred_check_branch
        %2175 = sbr.rel (%p2173) target = $region60
      $region59: #{tpu_custom_call.1} parent=5 // pred_region
        %s2176 = ssub.s32 %s16, 2
      $region60: #{tpu_custom_call.1} parent=5 // pred_fallthru
        _
    $region6: #{tpu_custom_call.1} parent=1 // loop_footer
      %s20 = sadd.s32 1, %s16
    $region7: #{tpu_custom_call.1} parent=1 // loop_footer_branch
      %15 = sbr.rel target = $region3
    $region8: #{tpu_custom_call.1} parent=1 // loop_exit
      _
    %2177 = vsyncpa [#allocation3], 1
    %s2178 = scalar_lea.sflag [#allocation3], 1
    %2179 = vsyncpa %s2178, 1
    %2180 = vsyncpa [#allocation6], 1
    %s2181 = scalar_lea.sflag [#allocation6], 1
    %2182 = vsyncpa %s2181, 1
    %2183 = vsyncpa [#allocation4], 1
    %s2184 = scalar_lea.sflag [#allocation4], 1
    %2185 = vsyncpa %s2184, 1

</llo_original>
